<compile_context>
chip_gen: v6e
topology: v6e:2x2x1
jax: 0.10.0
libtpu: 0.0.40
codegen_flags: <defaults>
</compile_context>

<pallas_src>
import functools

import jax
import jax.numpy as jnp
from jax import lax
from jax.experimental import pallas as pl
from jax.experimental.pallas import tpu as pltpu

NUM_CLASSES = 21
ASPP_RATES = (12, 24, 36)


# ----------------------------------------------------------------------------
# Pallas fused GEMM:  out = act(A @ W + bias [+ residual])
# ----------------------------------------------------------------------------
def _round_up(x, m):
    return (x + m - 1) // m * m


def _gemm_kernel(*refs, relu, nk, has_res):
    if has_res:
        a_ref, b_ref, bias_ref, res_ref, o_ref = refs
    else:
        a_ref, b_ref, bias_ref, o_ref = refs
        res_ref = None
    k = pl.program_id(2)

    @pl.when(k == 0)
    def _():
        o_ref[...] = jnp.zeros_like(o_ref)

    # bf16 x bf16 on the MXU, f32 accumulation directly in the resident
    # output block (output dtype is f32 and its block index is k-invariant).
    o_ref[...] += jnp.dot(a_ref[...], b_ref[...],
                          preferred_element_type=jnp.float32)

    @pl.when(k == nk - 1)
    def _():
        r = o_ref[...] + bias_ref[...]
        if res_ref is not None:
            r = r + res_ref[...]           # fused residual add
        if relu:
            r = jnp.maximum(r, 0.0)
        o_ref[...] = r


def _pick_tile_m(m):
    if m <= 512:
        return m                # single full block (no alignment requirement)
    for t in (512, 256, 128):
        if m % t == 0:
            return t
    return 256                  # rare: pad M


def _pick_tile_k(k):
    if k <= 2048:
        return k                # single full K block, no reduction grid
    for t in (2048, 1024, 512, 256):
        if k % t == 0:
            return t
    return 512                  # rare: pad K


def _pick_tile_n(n):
    if n <= 256:
        return n                # single full block
    for t in (256, 128):
        if n % t == 0:
            return t
    return 128                  # rare: pad N


def _fused_matmul(a, b, bias, relu, residual=None):
    """a: (M, K) bf16, b: (K, N) bf16, bias: (N,) f32, residual: (M, N) f32|None."""
    M, K = a.shape
    N = b.shape[1]
    tm, tk, tn = _pick_tile_m(M), _pick_tile_k(K), _pick_tile_n(N)
    Mp, Kp, Np = _round_up(M, tm), _round_up(K, tk), _round_up(N, tn)

    if (Mp, Kp) != (M, K):
        a = jnp.pad(a, ((0, Mp - M), (0, Kp - K)))
    if (Kp, Np) != (K, N):
        b = jnp.pad(b, ((0, Kp - K), (0, Np - N)))
    bias2 = bias.reshape(1, N)
    if Np != N:
        bias2 = jnp.pad(bias2, ((0, 0), (0, Np - N)))
    has_res = residual is not None
    if has_res and (Mp != M or Np != N):
        residual = jnp.pad(residual, ((0, Mp - M), (0, Np - N)))

    nm, nj, nk = Mp // tm, Np // tn, Kp // tk

    in_specs = [
        pl.BlockSpec((tm, tk), lambda i, j, k: (i, k)),   # A
        pl.BlockSpec((tk, tn), lambda i, j, k: (k, j)),   # W
        pl.BlockSpec((1, tn), lambda i, j, k: (0, j)),    # bias
    ]
    operands = [a, b, bias2]
    if has_res:
        in_specs.append(pl.BlockSpec((tm, tn), lambda i, j, k: (i, j)))
        operands.append(residual)

    bytes_accessed = (Mp * Kp * 2 + Kp * Np * 2 + Mp * Np * 4
                      + (Mp * Np * 4 if has_res else 0) + Np * 4)
    cost = pl.CostEstimate(flops=2 * Mp * Kp * Np, transcendentals=0,
                           bytes_accessed=bytes_accessed)

    out = pl.pallas_call(
        functools.partial(_gemm_kernel, relu=relu, nk=nk, has_res=has_res),
        out_shape=jax.ShapeDtypeStruct((Mp, Np), jnp.float32),
        grid_spec=pltpu.PrefetchScalarGridSpec(
            num_scalar_prefetch=0,
            grid=(nm, nj, nk),
            in_specs=in_specs,
            out_specs=pl.BlockSpec((tm, tn), lambda i, j, k: (i, j)),
        ),
        compiler_params=pltpu.CompilerParams(
            dimension_semantics=("parallel", "parallel", "arbitrary")),
        cost_estimate=cost,
    )(*operands)

    if (Mp, Np) != (M, N):
        out = out[:M, :N]
    return out


# ----------------------------------------------------------------------------
# Convolution (NHWC) = [reshape | im2col] + fused Pallas GEMM
# ----------------------------------------------------------------------------
@functools.partial(jax.jit, static_argnames=("kh", "kw", "stride", "padding",
                                             "dilation", "relu"))
def _conv2d_nhwc(x, w_mat, bias, residual, *, kh, kw, stride, padding,
                 dilation, relu):
    # x: (B, H, W, Cin) f32, w_mat: (Cin*kh*kw, Cout) bf16, bias: (Cout,) f32,
    # residual: (B, Ho, Wo, Cout) f32 or None (fused into GEMM epilogue).
    B = x.shape[0]
    xb = x.astype(jnp.bfloat16)            # cast BEFORE im2col: halves patch HBM
    if kh == 1 and kw == 1 and padding == 0:
        if stride != 1:
            xb = xb[:, ::stride, ::stride, :]
        Ho, Wo = xb.shape[1], xb.shape[2]
        a = xb.reshape(B * Ho * Wo, xb.shape[3])
    else:
        # Feature axis of patches is flattened (Cin, kh, kw) — matches the
        # (Cout, Cin, kh, kw) weight flattening used in _pack_conv.
        patches = lax.conv_general_dilated_patches(
            xb, (kh, kw), (stride, stride),
            padding=((padding, padding), (padding, padding)),
            rhs_dilation=(dilation, dilation),
            dimension_numbers=("NHWC", "HWIO", "NHWC"))
        Ho, Wo = patches.shape[1], patches.shape[2]
        a = patches.reshape(B * Ho * Wo, patches.shape[3])

    cout = w_mat.shape[1]
    res_mat = None
    if residual is not None:
        res_mat = residual.reshape(B * Ho * Wo, cout)
    out = _fused_matmul(a, w_mat, bias, relu, res_mat)
    return out.reshape(B, Ho, Wo, cout)


def conv2d(x, p, *, stride=1, padding=0, dilation=1, relu=False, residual=None):
    return _conv2d_nhwc(x, p["w"], p["b"], residual,
                        kh=p["kh"], kw=p["kw"], stride=stride, padding=padding,
                        dilation=dilation, relu=relu)


# ----------------------------------------------------------------------------
# Deterministic parameter initialization (eval-mode BatchNorm folded into conv,
# weights stored pre-reshaped as bf16 (K, Cout) GEMM matrices)
# ----------------------------------------------------------------------------
class _Keys:
    def __init__(self, seed):
        self._key = jax.random.PRNGKey(seed)

    def __call__(self):
        self._key, k = jax.random.split(self._key)
        return k


def _pack_conv(w, b):
    # w: (Cout, Cin, kh, kw) f32 (BN already folded), b: (Cout,) f32
    cout, cin, kh, kw = w.shape
    w_mat = w.reshape(cout, cin * kh * kw).T.astype(jnp.bfloat16)
    return {"w": w_mat, "b": b.astype(jnp.float32), "kh": kh, "kw": kw}


def init_conv_bn(kg, cin, cout, k):
    fan_in = cin * k * k
    w = jax.random.normal(kg(), (cout, cin, k, k), jnp.float32) * (1.0 / fan_in) ** 0.5
    gamma = 1.0 + 0.01 * jax.random.normal(kg(), (cout,), jnp.float32)
    beta = 0.01 * jax.random.normal(kg(), (cout,), jnp.float32)
    running_mean = jnp.zeros((cout,), jnp.float32)
    running_var = jnp.ones((cout,), jnp.float32)
    scale = gamma / jnp.sqrt(running_var + 1e-5)
    return _pack_conv(w * scale[:, None, None, None], beta - running_mean * scale)


def init_conv(kg, cin, cout, k):
    fan_in = cin * k * k
    w = jax.random.normal(kg(), (cout, cin, k, k), jnp.float32) * (1.0 / fan_in) ** 0.5
    b = 0.01 * jax.random.normal(kg(), (cout,), jnp.float32)
    return _pack_conv(w, b)


def init_bottleneck(kg, inplanes, planes, stride, dilation, downsample):
    p = {"conv1": init_conv_bn(kg, inplanes, planes, 1),
         "conv2": init_conv_bn(kg, planes, planes, 3),
         "conv3": init_conv_bn(kg, planes, planes * 4, 1),
         "stride": stride,
         "dilation": dilation}
    if downsample:
        p["ds"] = init_conv_bn(kg, inplanes, planes * 4, 1)
    return p


def init_resnet101_backbone(kg, in_channels):
    # ResNet-101, replace_stride_with_dilation=[False, True, True] (output stride 8)
    p = {"conv1": init_conv_bn(kg, in_channels, 64, 7)}
    inplanes, dilation = 64, 1
    cfg = [("layer1", 64, 3, 1, False),
           ("layer2", 128, 4, 2, False),
           ("layer3", 256, 23, 2, True),
           ("layer4", 512, 3, 2, True)]
    for name, planes, blocks, stride, dilate in cfg:
        prev_dilation = dilation
        if dilate:
            dilation *= stride
            stride = 1
        downsample = (stride != 1) or (inplanes != planes * 4)
        layer = [init_bottleneck(kg, inplanes, planes, stride, prev_dilation, downsample)]
        inplanes = planes * 4
        for _ in range(1, blocks):
            layer.append(init_bottleneck(kg, inplanes, planes, 1, dilation, False))
        p[name] = layer
    return p


def init_classifier(kg, num_classes):
    return {
        "aspp": {
            "b0": init_conv_bn(kg, 2048, 256, 1),
            "b1": init_conv_bn(kg, 2048, 256, 3),
            "b2": init_conv_bn(kg, 2048, 256, 3),
            "b3": init_conv_bn(kg, 2048, 256, 3),
            "pool": init_conv_bn(kg, 2048, 256, 1),
            "project": init_conv_bn(kg, 5 * 256, 256, 1),
        },
        "head_conv": init_conv_bn(kg, 256, 256, 3),
        "final": init_conv(kg, 256, num_classes, 1),
    }


def init_dual_source_deeplab(seed=0, num_classes=NUM_CLASSES):
    kg = _Keys(seed)
    return {
        "rgb": {"backbone": init_resnet101_backbone(kg, 3),
                "classifier": init_classifier(kg, num_classes)},
        # MS branch: backbone.conv1 replaced by Conv2d(8, 64, 7, stride=2, pad=3)
        "ms": {"backbone": init_resnet101_backbone(kg, 8),
               "classifier": init_classifier(kg, num_classes)},
        # fusion_type == "concat": Conv2d(2*num_classes, num_classes, 1)
        "fusion": init_conv(kg, num_classes * 2, num_classes, 1),
    }


# ----------------------------------------------------------------------------
# Forward pass (NHWC internally)
# ----------------------------------------------------------------------------
def _max_pool_3x3_s2(x):
    return lax.reduce_window(x, -jnp.inf, lax.max,
                             (1, 3, 3, 1), (1, 2, 2, 1),
                             ((0, 0), (1, 1), (1, 1), (0, 0)))


def bottleneck_fwd(x, p):
    if "ds" in p:
        identity = conv2d(x, p["ds"], stride=p["stride"], relu=False)
    else:
        identity = x
    out = conv2d(x, p["conv1"], relu=True)
    out = conv2d(out, p["conv2"], stride=p["stride"], dilation=p["dilation"],
                 padding=p["dilation"], relu=True)
    # residual add + final ReLU fused into the conv3 GEMM epilogue
    return conv2d(out, p["conv3"], relu=True, residual=identity)


def backbone_fwd(x, p):
    x = conv2d(x, p["conv1"], stride=2, padding=3, relu=True)
    x = _max_pool_3x3_s2(x)
    for name in ("layer1", "layer2", "layer3", "layer4"):
        for blk in p[name]:
            x = bottleneck_fwd(x, blk)
    return x


def classifier_fwd(x, p):
    B, H, W, _ = x.shape
    aspp = p["aspp"]
    branches = [conv2d(x, aspp["b0"], relu=True)]
    for name, rate in zip(("b1", "b2", "b3"), ASPP_RATES):
        branches.append(conv2d(x, aspp[name], dilation=rate, padding=rate, relu=True))
    gp = jnp.mean(x, axis=(1, 2), keepdims=True)            # AdaptiveAvgPool2d(1)
    gp = conv2d(gp, aspp["pool"], relu=True)
    branches.append(jnp.broadcast_to(gp, (B, H, W, gp.shape[3])))
    y = jnp.concatenate(branches, axis=-1)
    y = conv2d(y, aspp["project"], relu=True)                # Dropout(0.5): identity (eval)
    y = conv2d(y, p["head_conv"], padding=1, relu=True)
    return conv2d(y, p["final"], relu=False)


def deeplabv3_fwd(x, p):
    B, H, W, _ = x.shape
    feat = backbone_fwd(x, p["backbone"])
    out = classifier_fwd(feat, p["classifier"])
    # F.interpolate(..., mode="bilinear", align_corners=False)
    return jax.image.resize(out, (B, H, W, out.shape[3]), method="bilinear")


def dual_source_deeplab_fwd(rgb_x, ms_x, params):
    # Public API is NCHW (PyTorch convention); convert to NHWC exactly once.
    rgb = jnp.transpose(rgb_x, (0, 2, 3, 1))
    ms = jnp.transpose(ms_x, (0, 2, 3, 1))
    rgb_out = deeplabv3_fwd(rgb, params["rgb"])
    ms_out = deeplabv3_fwd(ms, params["ms"])
    fused_in = jnp.concatenate([rgb_out, ms_out], axis=-1)
    out = conv2d(fused_in, params["fusion"], relu=False)     # "concat" fusion
    return jnp.transpose(out, (0, 3, 1, 2))


# ----------------------------------------------------------------------------
if __name__ == "__main__":
    key = jax.random.PRNGKey(0)
    k1, k2 = jax.random.split(key)
    B, H, W = 2, 32, 32
    rgb_x = jax.random.normal(k1, (B, 3, H, W), jnp.float32)
    ms_x = jax.random.normal(k2, (B, 8, H, W), jnp.float32)

    params = init_dual_source_deeplab(seed=0, num_classes=NUM_CLASSES)

    out = dual_source_deeplab_fwd(rgb_x, ms_x, params)
    out = jax.block_until_ready(out)

    assert out.shape == (B, NUM_CLASSES, H, W), out.shape
    assert bool(jnp.all(jnp.isfinite(out)))
    print("KERNEL_OK")
</pallas_src>

<mosaic_0001>
module attributes {stable_mosaic.version = 11 : i64} {
  func.func @_gemm_kernel(%arg0: i32, %arg1: i32, %arg2: i32, %arg3: memref<512x147xbf16, #tpu.memory_space<vmem>>, %arg4: memref<147x64xbf16, #tpu.memory_space<vmem>>, %arg5: memref<1x64xf32, #tpu.memory_space<vmem>>, %arg6: memref<512x64xf32, #tpu.memory_space<vmem>>) attributes {dimension_semantics = [#tpu.dimension_semantics<parallel>, #tpu.dimension_semantics<parallel>, #tpu.dimension_semantics<arbitrary>], iteration_bounds = array<i64: 1, 1, 1>, scalar_prefetch = 0 : i64, scratch_operands = 0 : i64, tpu.core_type = #tpu.core_type<tc>, window_params = [{transform_indices = @transform_0, window_bounds = array<i64: 512, 147>}, {transform_indices = @transform_1, window_bounds = array<i64: 147, 64>}, {transform_indices = @transform_2, window_bounds = array<i64: 1, 64>}, {transform_indices = @transform_3, window_bounds = array<i64: 512, 64>}]} {
    %c0_i32 = arith.constant 0 : i32
    %0 = arith.cmpi eq, %arg2, %c0_i32 : i32
    %1 = arith.extui %0 : i1 to i32
    %c0_i32_0 = arith.constant 0 : i32
    %2 = arith.cmpi ne, %1, %c0_i32_0 : i32
    scf.if %2 {
      %cst_10 = arith.constant 0.000000e+00 : f32
      %12 = vector.broadcast %cst_10 : f32 to vector<512x64xf32>
      %c0_11 = arith.constant 0 : index
      %c0_12 = arith.constant 0 : index
      %13 = vector.load %arg6[%c0_11, %c0_12] : memref<512x64xf32, #tpu.memory_space<vmem>>, vector<512x64xf32>
      tpu.vector_store %arg6[%c0_11, %c0_12], %12 {strides = array<i32>} : memref<512x64xf32, #tpu.memory_space<vmem>>, vector<512x64xf32>,
    } else {
    }
    %c0 = arith.constant 0 : index
    %c0_1 = arith.constant 0 : index
    %3 = vector.load %arg6[%c0, %c0_1] : memref<512x64xf32, #tpu.memory_space<vmem>>, vector<512x64xf32>
    %c0_2 = arith.constant 0 : index
    %c0_3 = arith.constant 0 : index
    %4 = vector.load %arg3[%c0_2, %c0_3] : memref<512x147xbf16, #tpu.memory_space<vmem>>, vector<512x147xbf16>
    %c0_4 = arith.constant 0 : index
    %c0_5 = arith.constant 0 : index
    %5 = vector.load %arg4[%c0_4, %c0_5] : memref<147x64xbf16, #tpu.memory_space<vmem>>, vector<147x64xbf16>
    %cst = arith.constant dense<0.000000e+00> : vector<512x64xf32>
    %6 = tpu.matmul %4, %5, %cst {dimension_numbers = #tpu.dot_dimension_numbers<[1], [0], [0], [1], [0, 0, 1, 1], [], []>} : vector<512x147xbf16>, vector<147x64xbf16>, vector<512x64xf32> -> vector<512x64xf32>
    %7 = arith.addf %3, %6 : vector<512x64xf32>
    %c0_6 = arith.constant 0 : index
    %c0_7 = arith.constant 0 : index
    %8 = vector.load %arg6[%c0_6, %c0_7] : memref<512x64xf32, #tpu.memory_space<vmem>>, vector<512x64xf32>
    tpu.vector_store %arg6[%c0_6, %c0_7], %7 {strides = array<i32>} : memref<512x64xf32, #tpu.memory_space<vmem>>, vector<512x64xf32>,
    %c0_i32_8 = arith.constant 0 : i32
    %9 = arith.cmpi eq, %arg2, %c0_i32_8 : i32
    %10 = arith.extui %9 : i1 to i32
    %c0_i32_9 = arith.constant 0 : i32
    %11 = arith.cmpi ne, %10, %c0_i32_9 : i32
    scf.if %11 {
      %c0_10 = arith.constant 0 : index
      %c0_11 = arith.constant 0 : index
      %12 = vector.load %arg6[%c0_10, %c0_11] : memref<512x64xf32, #tpu.memory_space<vmem>>, vector<512x64xf32>
      %c0_12 = arith.constant 0 : index
      %c0_13 = arith.constant 0 : index
      %13 = vector.load %arg5[%c0_12, %c0_13] : memref<1x64xf32, #tpu.memory_space<vmem>>, vector<1x64xf32>
      %14 = vector.broadcast %13 : vector<1x64xf32> to vector<512x64xf32>
      %15 = arith.addf %12, %14 : vector<512x64xf32>
      %cst_14 = arith.constant 0.000000e+00 : f32
      %16 = vector.broadcast %cst_14 : f32 to vector<512x64xf32>
      %17 = arith.maximumf %15, %16 : vector<512x64xf32>
      %c0_15 = arith.constant 0 : index
      %c0_16 = arith.constant 0 : index
      %18 = vector.load %arg6[%c0_15, %c0_16] : memref<512x64xf32, #tpu.memory_space<vmem>>, vector<512x64xf32>
      tpu.vector_store %arg6[%c0_15, %c0_16], %17 {strides = array<i32>} : memref<512x64xf32, #tpu.memory_space<vmem>>, vector<512x64xf32>,
    } else {
    }
    return
  }
  func.func @transform_0(%arg0: i32, %arg1: i32, %arg2: i32) -> (i32, i32) {
    %c0_i32 = arith.constant 0 : i32
    return %arg0, %arg2 : i32, i32
  }
  func.func @transform_1(%arg0: i32, %arg1: i32, %arg2: i32) -> (i32, i32) {
    %c0_i32 = arith.constant 0 : i32
    return %arg2, %arg1 : i32, i32
  }
  func.func @transform_2(%arg0: i32, %arg1: i32, %arg2: i32) -> (i32, i32) {
    %c0_i32 = arith.constant 0 : i32
    %c0_i32_0 = arith.constant 0 : i32
    return %c0_i32, %arg1 : i32, i32
  }
  func.func @transform_3(%arg0: i32, %arg1: i32, %arg2: i32) -> (i32, i32) {
    %c0_i32 = arith.constant 0 : i32
    return %arg0, %arg1 : i32, i32
  }
}

</mosaic_0001>

<llo_original>
// kernel: _conv2d_nhwc.1
$region0: #{_conv2d_nhwc.1}
  #allocation0 [shape = 'u32[]', space=smem, size = 0x4, offset = 0x4, fixed_abs, tag = 'smem constant byte address 0x4 - core index']
  #allocation1 [shape = 'u32[144,128]{1,0:T(1,128)}', space=vmem, size = 0x12000, scoped, tag = 'internal scratch']
  %s0 = inlined_call_operand.vmem [shape: bf16[512,147], index: 0, kind: input, shape index: {}]
  %s1 = inlined_call_operand.vmem [shape: bf16[147,64], index: 1, kind: input, shape index: {}]
  %s2 = inlined_call_operand.vmem [shape: f32[1,64], index: 2, kind: input, shape index: {}]
  %s3 = inlined_call_operand.hbm [shape: f32[512,64], index: 3, kind: output, shape index: {}]
  %s4 = sld [smem:[#allocation0]]
  $region30: #{_conv2d_nhwc.1} parent=0
    _
  %s6 = ssub.s32 1, %s4
  %s7 = scalar_select 0, %s6, %s4
  $region1: #{_conv2d_nhwc.1} parent=0
    #allocation2 [shape = 'u8[262144]{0}', space=vmem, size = 0x40000, scoped, tag = 'output window, operand 0, single buffered']
    #allocation3 [shape = 's32[1]{0}', space=sflag, size = 0x4, scoped, tag = 'scoped memory for _conv2d_nhwc.1']
    %8 = vsyncpa [#allocation3], 0
    // Predicated region
    $region2: #{_conv2d_nhwc.1} parent=1 // pred_check
      _
    $region3: #{_conv2d_nhwc.1} parent=1 // pred_check_branch
      %10 = sbr.rel (0) target = $region5
    $region4: #{_conv2d_nhwc.1} parent=1 // pred_region
      _
    $region5: #{_conv2d_nhwc.1} parent=1 // pred_fallthru
      _
    // Predicated region
    $region6: #{_conv2d_nhwc.1} parent=1 // pred_check
      _
    $region7: #{_conv2d_nhwc.1} parent=1 // pred_check_branch
      %12 = sbr.rel (0) target = $region9
    $region8: #{_conv2d_nhwc.1} parent=1 // pred_region
      _
    $region9: #{_conv2d_nhwc.1} parent=1 // pred_fallthru
      _
    // Predicated region
    $region10: #{_conv2d_nhwc.1} parent=1 // pred_check
      _
    $region11: #{_conv2d_nhwc.1} parent=1 // pred_check_branch
      %14 = sbr.rel (0) target = $region13
    $region12: #{_conv2d_nhwc.1} parent=1 // pred_region
      _
    $region13: #{_conv2d_nhwc.1} parent=1 // pred_fallthru
      _
    %p16 = scmp.eq.s32.totalorder 0, 0
    // Predicated region
    $region14: #{_conv2d_nhwc.1} parent=1 // pred_check
      %p17 = pneg %p16
    $region15: #{_conv2d_nhwc.1} parent=1 // pred_check_branch
      %19 = sbr.rel (%p17) target = $region17
    $region16: #{_conv2d_nhwc.1} parent=1 // pred_region
      %vm20 = vcmask 523264
      %21 = vst.msk [vmem:[#allocation2] sm:$0xff] %vm20, 0.0
      %22 = vst.msk [vmem:[#allocation2 + $0x8] sm:$0xff] %vm20, 0.0
      %23 = vst.msk [vmem:[#allocation2 + $0x10] sm:$0xff] %vm20, 0.0
      %24 = vst.msk [vmem:[#allocation2 + $0x18] sm:$0xff] %vm20, 0.0
      %25 = vst.msk [vmem:[#allocation2 + $0x20] sm:$0xff] %vm20, 0.0
      %26 = vst.msk [vmem:[#allocation2 + $0x28] sm:$0xff] %vm20, 0.0
      %27 = vst.msk [vmem:[#allocation2 + $0x30] sm:$0xff] %vm20, 0.0
      %28 = vst.msk [vmem:[#allocation2 + $0x38] sm:$0xff] %vm20, 0.0
      %29 = vst.msk [vmem:[#allocation2 + $0x40] sm:$0xff] %vm20, 0.0
      %30 = vst.msk [vmem:[#allocation2 + $0x48] sm:$0xff] %vm20, 0.0
      %31 = vst.msk [vmem:[#allocation2 + $0x50] sm:$0xff] %vm20, 0.0
      %32 = vst.msk [vmem:[#allocation2 + $0x58] sm:$0xff] %vm20, 0.0
      %33 = vst.msk [vmem:[#allocation2 + $0x60] sm:$0xff] %vm20, 0.0
      %34 = vst.msk [vmem:[#allocation2 + $0x68] sm:$0xff] %vm20, 0.0
      %35 = vst.msk [vmem:[#allocation2 + $0x70] sm:$0xff] %vm20, 0.0
      %36 = vst.msk [vmem:[#allocation2 + $0x78] sm:$0xff] %vm20, 0.0
      %37 = vst.msk [vmem:[#allocation2 + $0x80] sm:$0xff] %vm20, 0.0
      %38 = vst.msk [vmem:[#allocation2 + $0x88] sm:$0xff] %vm20, 0.0
      %39 = vst.msk [vmem:[#allocation2 + $0x90] sm:$0xff] %vm20, 0.0
      %40 = vst.msk [vmem:[#allocation2 + $0x98] sm:$0xff] %vm20, 0.0
      %41 = vst.msk [vmem:[#allocation2 + $0xa0] sm:$0xff] %vm20, 0.0
      %42 = vst.msk [vmem:[#allocation2 + $0xa8] sm:$0xff] %vm20, 0.0
      %43 = vst.msk [vmem:[#allocation2 + $0xb0] sm:$0xff] %vm20, 0.0
      %44 = vst.msk [vmem:[#allocation2 + $0xb8] sm:$0xff] %vm20, 0.0
      %45 = vst.msk [vmem:[#allocation2 + $0xc0] sm:$0xff] %vm20, 0.0
      %46 = vst.msk [vmem:[#allocation2 + $0xc8] sm:$0xff] %vm20, 0.0
      %47 = vst.msk [vmem:[#allocation2 + $0xd0] sm:$0xff] %vm20, 0.0
      %48 = vst.msk [vmem:[#allocation2 + $0xd8] sm:$0xff] %vm20, 0.0
      %49 = vst.msk [vmem:[#allocation2 + $0xe0] sm:$0xff] %vm20, 0.0
      %50 = vst.msk [vmem:[#allocation2 + $0xe8] sm:$0xff] %vm20, 0.0
      %51 = vst.msk [vmem:[#allocation2 + $0xf0] sm:$0xff] %vm20, 0.0
      %52 = vst.msk [vmem:[#allocation2 + $0xf8] sm:$0xff] %vm20, 0.0
      %53 = vst.msk [vmem:[#allocation2 + $0x100] sm:$0xff] %vm20, 0.0
      %54 = vst.msk [vmem:[#allocation2 + $0x108] sm:$0xff] %vm20, 0.0
      %55 = vst.msk [vmem:[#allocation2 + $0x110] sm:$0xff] %vm20, 0.0
      %56 = vst.msk [vmem:[#allocation2 + $0x118] sm:$0xff] %vm20, 0.0
      %57 = vst.msk [vmem:[#allocation2 + $0x120] sm:$0xff] %vm20, 0.0
      %58 = vst.msk [vmem:[#allocation2 + $0x128] sm:$0xff] %vm20, 0.0
      %59 = vst.msk [vmem:[#allocation2 + $0x130] sm:$0xff] %vm20, 0.0
      %60 = vst.msk [vmem:[#allocation2 + $0x138] sm:$0xff] %vm20, 0.0
      %61 = vst.msk [vmem:[#allocation2 + $0x140] sm:$0xff] %vm20, 0.0
      %62 = vst.msk [vmem:[#allocation2 + $0x148] sm:$0xff] %vm20, 0.0
      %63 = vst.msk [vmem:[#allocation2 + $0x150] sm:$0xff] %vm20, 0.0
      %64 = vst.msk [vmem:[#allocation2 + $0x158] sm:$0xff] %vm20, 0.0
      %65 = vst.msk [vmem:[#allocation2 + $0x160] sm:$0xff] %vm20, 0.0
      %66 = vst.msk [vmem:[#allocation2 + $0x168] sm:$0xff] %vm20, 0.0
      %67 = vst.msk [vmem:[#allocation2 + $0x170] sm:$0xff] %vm20, 0.0
      %68 = vst.msk [vmem:[#allocation2 + $0x178] sm:$0xff] %vm20, 0.0
      %69 = vst.msk [vmem:[#allocation2 + $0x180] sm:$0xff] %vm20, 0.0
      %70 = vst.msk [vmem:[#allocation2 + $0x188] sm:$0xff] %vm20, 0.0
      %71 = vst.msk [vmem:[#allocation2 + $0x190] sm:$0xff] %vm20, 0.0
      %72 = vst.msk [vmem:[#allocation2 + $0x198] sm:$0xff] %vm20, 0.0
      %73 = vst.msk [vmem:[#allocation2 + $0x1a0] sm:$0xff] %vm20, 0.0
      %74 = vst.msk [vmem:[#allocation2 + $0x1a8] sm:$0xff] %vm20, 0.0
      %75 = vst.msk [vmem:[#allocation2 + $0x1b0] sm:$0xff] %vm20, 0.0
      %76 = vst.msk [vmem:[#allocation2 + $0x1b8] sm:$0xff] %vm20, 0.0
      %77 = vst.msk [vmem:[#allocation2 + $0x1c0] sm:$0xff] %vm20, 0.0
      %78 = vst.msk [vmem:[#allocation2 + $0x1c8] sm:$0xff] %vm20, 0.0
      %79 = vst.msk [vmem:[#allocation2 + $0x1d0] sm:$0xff] %vm20, 0.0
      %80 = vst.msk [vmem:[#allocation2 + $0x1d8] sm:$0xff] %vm20, 0.0
      %81 = vst.msk [vmem:[#allocation2 + $0x1e0] sm:$0xff] %vm20, 0.0
      %82 = vst.msk [vmem:[#allocation2 + $0x1e8] sm:$0xff] %vm20, 0.0
      %83 = vst.msk [vmem:[#allocation2 + $0x1f0] sm:$0xff] %vm20, 0.0
      %84 = vst.msk [vmem:[#allocation2 + $0x1f8] sm:$0xff] %vm20, 0.0
    $region17: #{_conv2d_nhwc.1} parent=1 // pred_fallthru
      _
    %v85 = vld [vmem:[#allocation2] sm:$0xff]
    %v86 = vld [vmem:[#allocation2 + $0x8] sm:$0xff]
    %v87 = vld [vmem:[#allocation2 + $0x10] sm:$0xff]
    %v88 = vld [vmem:[#allocation2 + $0x18] sm:$0xff]
    %v89 = vld [vmem:[#allocation2 + $0x20] sm:$0xff]
    %v90 = vld [vmem:[#allocation2 + $0x28] sm:$0xff]
    %v91 = vld [vmem:[#allocation2 + $0x30] sm:$0xff]
    %v92 = vld [vmem:[#allocation2 + $0x38] sm:$0xff]
    %v93 = vld [vmem:[#allocation2 + $0x40] sm:$0xff]
    %v94 = vld [vmem:[#allocation2 + $0x48] sm:$0xff]
    %v95 = vld [vmem:[#allocation2 + $0x50] sm:$0xff]
    %v96 = vld [vmem:[#allocation2 + $0x58] sm:$0xff]
    %v97 = vld [vmem:[#allocation2 + $0x60] sm:$0xff]
    %v98 = vld [vmem:[#allocation2 + $0x68] sm:$0xff]
    %v99 = vld [vmem:[#allocation2 + $0x70] sm:$0xff]
    %v100 = vld [vmem:[#allocation2 + $0x78] sm:$0xff]
    %v101 = vld [vmem:[#allocation2 + $0x80] sm:$0xff]
    %v102 = vld [vmem:[#allocation2 + $0x88] sm:$0xff]
    %v103 = vld [vmem:[#allocation2 + $0x90] sm:$0xff]
    %v104 = vld [vmem:[#allocation2 + $0x98] sm:$0xff]
    %v105 = vld [vmem:[#allocation2 + $0xa0] sm:$0xff]
    %v106 = vld [vmem:[#allocation2 + $0xa8] sm:$0xff]
    %v107 = vld [vmem:[#allocation2 + $0xb0] sm:$0xff]
    %v108 = vld [vmem:[#allocation2 + $0xb8] sm:$0xff]
    %v109 = vld [vmem:[#allocation2 + $0xc0] sm:$0xff]
    %v110 = vld [vmem:[#allocation2 + $0xc8] sm:$0xff]
    %v111 = vld [vmem:[#allocation2 + $0xd0] sm:$0xff]
    %v112 = vld [vmem:[#allocation2 + $0xd8] sm:$0xff]
    %v113 = vld [vmem:[#allocation2 + $0xe0] sm:$0xff]
    %v114 = vld [vmem:[#allocation2 + $0xe8] sm:$0xff]
    %v115 = vld [vmem:[#allocation2 + $0xf0] sm:$0xff]
    %v116 = vld [vmem:[#allocation2 + $0xf8] sm:$0xff]
    %v117 = vld [vmem:[#allocation2 + $0x100] sm:$0xff]
    %v118 = vld [vmem:[#allocation2 + $0x108] sm:$0xff]
    %v119 = vld [vmem:[#allocation2 + $0x110] sm:$0xff]
    %v120 = vld [vmem:[#allocation2 + $0x118] sm:$0xff]
    %v121 = vld [vmem:[#allocation2 + $0x120] sm:$0xff]
    %v122 = vld [vmem:[#allocation2 + $0x128] sm:$0xff]
    %v123 = vld [vmem:[#allocation2 + $0x130] sm:$0xff]
    %v124 = vld [vmem:[#allocation2 + $0x138] sm:$0xff]
    %v125 = vld [vmem:[#allocation2 + $0x140] sm:$0xff]
    %v126 = vld [vmem:[#allocation2 + $0x148] sm:$0xff]
    %v127 = vld [vmem:[#allocation2 + $0x150] sm:$0xff]
    %v128 = vld [vmem:[#allocation2 + $0x158] sm:$0xff]
    %v129 = vld [vmem:[#allocation2 + $0x160] sm:$0xff]
    %v130 = vld [vmem:[#allocation2 + $0x168] sm:$0xff]
    %v131 = vld [vmem:[#allocation2 + $0x170] sm:$0xff]
    %v132 = vld [vmem:[#allocation2 + $0x178] sm:$0xff]
    %v133 = vld [vmem:[#allocation2 + $0x180] sm:$0xff]
    %v134 = vld [vmem:[#allocation2 + $0x188] sm:$0xff]
    %v135 = vld [vmem:[#allocation2 + $0x190] sm:$0xff]
    %v136 = vld [vmem:[#allocation2 + $0x198] sm:$0xff]
    %v137 = vld [vmem:[#allocation2 + $0x1a0] sm:$0xff]
    %v138 = vld [vmem:[#allocation2 + $0x1a8] sm:$0xff]
    %v139 = vld [vmem:[#allocation2 + $0x1b0] sm:$0xff]
    %v140 = vld [vmem:[#allocation2 + $0x1b8] sm:$0xff]
    %v141 = vld [vmem:[#allocation2 + $0x1c0] sm:$0xff]
    %v142 = vld [vmem:[#allocation2 + $0x1c8] sm:$0xff]
    %v143 = vld [vmem:[#allocation2 + $0x1d0] sm:$0xff]
    %v144 = vld [vmem:[#allocation2 + $0x1d8] sm:$0xff]
    %v145 = vld [vmem:[#allocation2 + $0x1e0] sm:$0xff]
    %v146 = vld [vmem:[#allocation2 + $0x1e8] sm:$0xff]
    %v147 = vld [vmem:[#allocation2 + $0x1f0] sm:$0xff]
    %v148 = vld [vmem:[#allocation2 + $0x1f8] sm:$0xff]
    %v149 = vld [vmem:[%s0] sm:$0xff]
    %v150 = vld [vmem:[%s0 + $0x8] sm:$0xff]
    %v151 = vld [vmem:[%s0 + $0x10] sm:$0xff]
    %v152 = vld [vmem:[%s0 + $0x18] sm:$0xff]
    %v153 = vld [vmem:[%s0 + $0x20] sm:$0xff]
    %v154 = vld [vmem:[%s0 + $0x28] sm:$0xff]
    %v155 = vld [vmem:[%s0 + $0x30] sm:$0xff]
    %v156 = vld [vmem:[%s0 + $0x38] sm:$0xff]
    %v157 = vld [vmem:[%s0 + $0x40] sm:$0xff]
    %v158 = vld [vmem:[%s0 + $0x48] sm:$0xff]
    %v159 = vld [vmem:[%s0 + $0x50] sm:$0xff]
    %v160 = vld [vmem:[%s0 + $0x58] sm:$0xff]
    %v161 = vld [vmem:[%s0 + $0x60] sm:$0xff]
    %v162 = vld [vmem:[%s0 + $0x68] sm:$0xff]
    %v163 = vld [vmem:[%s0 + $0x70] sm:$0xff]
    %v164 = vld [vmem:[%s0 + $0x78] sm:$0xff]
    %v165 = vld [vmem:[%s0 + $0x80] sm:$0xff]
    %v166 = vld [vmem:[%s0 + $0x88] sm:$0xff]
    %v167 = vld [vmem:[%s0 + $0x90] sm:$0xff]
    %v168 = vld [vmem:[%s0 + $0x98] sm:$0xff]
    %v169 = vld [vmem:[%s0 + $0xa0] sm:$0xff]
    %v170 = vld [vmem:[%s0 + $0xa8] sm:$0xff]
    %v171 = vld [vmem:[%s0 + $0xb0] sm:$0xff]
    %v172 = vld [vmem:[%s0 + $0xb8] sm:$0xff]
    %v173 = vld [vmem:[%s0 + $0xc0] sm:$0xff]
    %v174 = vld [vmem:[%s0 + $0xc8] sm:$0xff]
    %v175 = vld [vmem:[%s0 + $0xd0] sm:$0xff]
    %v176 = vld [vmem:[%s0 + $0xd8] sm:$0xff]
    %v177 = vld [vmem:[%s0 + $0xe0] sm:$0xff]
    %v178 = vld [vmem:[%s0 + $0xe8] sm:$0xff]
    %v179 = vld [vmem:[%s0 + $0xf0] sm:$0xff]
    %v180 = vld [vmem:[%s0 + $0xf8] sm:$0xff]
    %v181 = vld [vmem:[%s0 + $0x100] sm:$0xff]
    %v182 = vld [vmem:[%s0 + $0x108] sm:$0xff]
    %v183 = vld [vmem:[%s0 + $0x110] sm:$0xff]
    %v184 = vld [vmem:[%s0 + $0x118] sm:$0xff]
    %v185 = vld [vmem:[%s0 + $0x120] sm:$0xff]
    %v186 = vld [vmem:[%s0 + $0x128] sm:$0xff]
    %v187 = vld [vmem:[%s0 + $0x130] sm:$0xff]
    %v188 = vld [vmem:[%s0 + $0x138] sm:$0xff]
    %v189 = vld [vmem:[%s0 + $0x140] sm:$0xff]
    %v190 = vld [vmem:[%s0 + $0x148] sm:$0xff]
    %v191 = vld [vmem:[%s0 + $0x150] sm:$0xff]
    %v192 = vld [vmem:[%s0 + $0x158] sm:$0xff]
    %v193 = vld [vmem:[%s0 + $0x160] sm:$0xff]
    %v194 = vld [vmem:[%s0 + $0x168] sm:$0xff]
    %v195 = vld [vmem:[%s0 + $0x170] sm:$0xff]
    %v196 = vld [vmem:[%s0 + $0x178] sm:$0xff]
    %v197 = vld [vmem:[%s0 + $0x180] sm:$0xff]
    %v198 = vld [vmem:[%s0 + $0x188] sm:$0xff]
    %v199 = vld [vmem:[%s0 + $0x190] sm:$0xff]
    %v200 = vld [vmem:[%s0 + $0x198] sm:$0xff]
    %v201 = vld [vmem:[%s0 + $0x1a0] sm:$0xff]
    %v202 = vld [vmem:[%s0 + $0x1a8] sm:$0xff]
    %v203 = vld [vmem:[%s0 + $0x1b0] sm:$0xff]
    %v204 = vld [vmem:[%s0 + $0x1b8] sm:$0xff]
    %v205 = vld [vmem:[%s0 + $0x1c0] sm:$0xff]
    %v206 = vld [vmem:[%s0 + $0x1c8] sm:$0xff]
    %v207 = vld [vmem:[%s0 + $0x1d0] sm:$0xff]
    %v208 = vld [vmem:[%s0 + $0x1d8] sm:$0xff]
    %v209 = vld [vmem:[%s0 + $0x1e0] sm:$0xff]
    %v210 = vld [vmem:[%s0 + $0x1e8] sm:$0xff]
    %v211 = vld [vmem:[%s0 + $0x1f0] sm:$0xff]
    %v212 = vld [vmem:[%s0 + $0x1f8] sm:$0xff]
    %v213 = vld [vmem:[%s1] sm:$0xf]
    %v214 = vld [vmem:[%s1 + $0x4] sm:$0xf]
    %v215 = vld [vmem:[%s1 + $0x8] sm:$0xf]
    %v216 = vld [vmem:[%s1 + $0xc] sm:$0xf]
    %v217 = vld [vmem:[%s1 + $0x10] sm:$0xf]
    %v218 = vld [vmem:[%s1 + $0x14] sm:$0xf]
    %v219 = vld [vmem:[%s1 + $0x18] sm:$0xf]
    %v220 = vld [vmem:[%s1 + $0x1c] sm:$0xf]
    %v221 = vld [vmem:[%s1 + $0x20] sm:$0xf]
    %v222 = vld [vmem:[%s1 + $0x24] sm:$0xf]
    %v223 = vld [vmem:[%s1 + $0x28] sm:$0xf]
    %v224 = vld [vmem:[%s1 + $0x2c] sm:$0xf]
    %v225 = vld [vmem:[%s1 + $0x30] sm:$0xf]
    %v226 = vld [vmem:[%s1 + $0x34] sm:$0xf]
    %v227 = vld [vmem:[%s1 + $0x38] sm:$0xf]
    %v228 = vld [vmem:[%s1 + $0x3c] sm:$0xf]
    %v229 = vld [vmem:[%s1 + $0x40] sm:$0xf]
    %v230 = vld [vmem:[%s1 + $0x44] sm:$0xf]
    %v231 = vld [vmem:[%s1 + $0x48] sm:$0x3]
    %v296 = vunpack.c.l.b16 %v149
    %v297 = vunpack.c.h.b16 %v149
    %v298 = vunpack.c.l.b16 %v150
    %v299 = vunpack.c.h.b16 %v150
    %v300 = vunpack.c.l.b16 %v151
    %v301 = vunpack.c.h.b16 %v151
    %v302 = vunpack.c.l.b16 %v152
    %v303 = vunpack.c.h.b16 %v152
    %v304 = vunpack.c.l.b16 %v153
    %v305 = vunpack.c.h.b16 %v153
    %v306 = vunpack.c.l.b16 %v154
    %v307 = vunpack.c.h.b16 %v154
    %v308 = vunpack.c.l.b16 %v155
    %v309 = vunpack.c.h.b16 %v155
    %v310 = vunpack.c.l.b16 %v156
    %v311 = vunpack.c.h.b16 %v156
    %v312 = vunpack.c.l.b16 %v157
    %v313 = vunpack.c.h.b16 %v157
    %v314 = vunpack.c.l.b16 %v158
    %v315 = vunpack.c.h.b16 %v158
    %v316 = vunpack.c.l.b16 %v159
    %v317 = vunpack.c.h.b16 %v159
    %v318 = vunpack.c.l.b16 %v160
    %v319 = vunpack.c.h.b16 %v160
    %v320 = vunpack.c.l.b16 %v161
    %v321 = vunpack.c.h.b16 %v161
    %v322 = vunpack.c.l.b16 %v162
    %v323 = vunpack.c.h.b16 %v162
    %v324 = vunpack.c.l.b16 %v163
    %v325 = vunpack.c.h.b16 %v163
    %v326 = vunpack.c.l.b16 %v164
    %v327 = vunpack.c.h.b16 %v164
    %v328 = vunpack.c.l.b16 %v165
    %v329 = vunpack.c.h.b16 %v165
    %v330 = vunpack.c.l.b16 %v166
    %v331 = vunpack.c.h.b16 %v166
    %v332 = vunpack.c.l.b16 %v167
    %v333 = vunpack.c.h.b16 %v167
    %v334 = vunpack.c.l.b16 %v168
    %v335 = vunpack.c.h.b16 %v168
    %v336 = vunpack.c.l.b16 %v169
    %v337 = vunpack.c.h.b16 %v169
    %v338 = vunpack.c.l.b16 %v170
    %v339 = vunpack.c.h.b16 %v170
    %v340 = vunpack.c.l.b16 %v171
    %v341 = vunpack.c.h.b16 %v171
    %v342 = vunpack.c.l.b16 %v172
    %v343 = vunpack.c.h.b16 %v172
    %v344 = vunpack.c.l.b16 %v173
    %v345 = vunpack.c.h.b16 %v173
    %v346 = vunpack.c.l.b16 %v174
    %v347 = vunpack.c.h.b16 %v174
    %v348 = vunpack.c.l.b16 %v175
    %v349 = vunpack.c.h.b16 %v175
    %v350 = vunpack.c.l.b16 %v176
    %v351 = vunpack.c.h.b16 %v176
    %v352 = vunpack.c.l.b16 %v177
    %v353 = vunpack.c.h.b16 %v177
    %v354 = vunpack.c.l.b16 %v178
    %v355 = vunpack.c.h.b16 %v178
    %v356 = vunpack.c.l.b16 %v179
    %v357 = vunpack.c.h.b16 %v179
    %v358 = vunpack.c.l.b16 %v180
    %v359 = vunpack.c.h.b16 %v180
    %v360 = vunpack.c.l.b16 %v181
    %v361 = vunpack.c.h.b16 %v181
    %v362 = vunpack.c.l.b16 %v182
    %v363 = vunpack.c.h.b16 %v182
    %v364 = vunpack.c.l.b16 %v183
    %v365 = vunpack.c.h.b16 %v183
    %v366 = vunpack.c.l.b16 %v184
    %v367 = vunpack.c.h.b16 %v184
    %v368 = vunpack.c.l.b16 %v185
    %v369 = vunpack.c.h.b16 %v185
    %v370 = vunpack.c.l.b16 %v186
    %v371 = vunpack.c.h.b16 %v186
    %v372 = vunpack.c.l.b16 %v187
    %v373 = vunpack.c.h.b16 %v187
    %v374 = vunpack.c.l.b16 %v188
    %v375 = vunpack.c.h.b16 %v188
    %v376 = vunpack.c.l.b16 %v189
    %v377 = vunpack.c.h.b16 %v189
    %v378 = vunpack.c.l.b16 %v190
    %v379 = vunpack.c.h.b16 %v190
    %v380 = vunpack.c.l.b16 %v191
    %v381 = vunpack.c.h.b16 %v191
    %v382 = vunpack.c.l.b16 %v192
    %v383 = vunpack.c.h.b16 %v192
    %v384 = vunpack.c.l.b16 %v193
    %v385 = vunpack.c.h.b16 %v193
    %v386 = vunpack.c.l.b16 %v194
    %v387 = vunpack.c.h.b16 %v194
    %v388 = vunpack.c.l.b16 %v195
    %v389 = vunpack.c.h.b16 %v195
    %v390 = vunpack.c.l.b16 %v196
    %v391 = vunpack.c.h.b16 %v196
    %v392 = vunpack.c.l.b16 %v197
    %v393 = vunpack.c.h.b16 %v197
    %v394 = vunpack.c.l.b16 %v198
    %v395 = vunpack.c.h.b16 %v198
    %v396 = vunpack.c.l.b16 %v199
    %v397 = vunpack.c.h.b16 %v199
    %v398 = vunpack.c.l.b16 %v200
    %v399 = vunpack.c.h.b16 %v200
    %v400 = vunpack.c.l.b16 %v201
    %v401 = vunpack.c.h.b16 %v201
    %v402 = vunpack.c.l.b16 %v202
    %v403 = vunpack.c.h.b16 %v202
    %v404 = vunpack.c.l.b16 %v203
    %v405 = vunpack.c.h.b16 %v203
    %v406 = vunpack.c.l.b16 %v204
    %v407 = vunpack.c.h.b16 %v204
    %v408 = vunpack.c.l.b16 %v205
    %v409 = vunpack.c.h.b16 %v205
    %v410 = vunpack.c.l.b16 %v206
    %v411 = vunpack.c.h.b16 %v206
    %v412 = vunpack.c.l.b16 %v207
    %v413 = vunpack.c.h.b16 %v207
    %v414 = vunpack.c.l.b16 %v208
    %v415 = vunpack.c.h.b16 %v208
    %v416 = vunpack.c.l.b16 %v209
    %v417 = vunpack.c.h.b16 %v209
    %v418 = vunpack.c.l.b16 %v210
    %v419 = vunpack.c.h.b16 %v210
    %v420 = vunpack.c.l.b16 %v211
    %v421 = vunpack.c.h.b16 %v211
    %v422 = vunpack.c.l.b16 %v212
    %v423 = vunpack.c.h.b16 %v212
    %v424 = vpack.c.b16 %v298, %v296
    %v425 = vpack.c.b16 %v299, %v297
    %v426 = vpack.c.b16 %v302, %v300
    %v427 = vpack.c.b16 %v303, %v301
    %v428 = vpack.c.b16 %v306, %v304
    %v429 = vpack.c.b16 %v307, %v305
    %v430 = vpack.c.b16 %v310, %v308
    %v431 = vpack.c.b16 %v311, %v309
    %v432 = vpack.c.b16 %v314, %v312
    %v433 = vpack.c.b16 %v315, %v313
    %v434 = vpack.c.b16 %v318, %v316
    %v435 = vpack.c.b16 %v319, %v317
    %v436 = vpack.c.b16 %v322, %v320
    %v437 = vpack.c.b16 %v323, %v321
    %v438 = vpack.c.b16 %v326, %v324
    %v439 = vpack.c.b16 %v327, %v325
    %v440 = vpack.c.b16 %v330, %v328
    %v441 = vpack.c.b16 %v331, %v329
    %v442 = vpack.c.b16 %v334, %v332
    %v443 = vpack.c.b16 %v335, %v333
    %v444 = vpack.c.b16 %v338, %v336
    %v445 = vpack.c.b16 %v339, %v337
    %v446 = vpack.c.b16 %v342, %v340
    %v447 = vpack.c.b16 %v343, %v341
    %v448 = vpack.c.b16 %v346, %v344
    %v449 = vpack.c.b16 %v347, %v345
    %v450 = vpack.c.b16 %v350, %v348
    %v451 = vpack.c.b16 %v351, %v349
    %v452 = vpack.c.b16 %v354, %v352
    %v453 = vpack.c.b16 %v355, %v353
    %v454 = vpack.c.b16 %v358, %v356
    %v455 = vpack.c.b16 %v359, %v357
    %v456 = vpack.c.b16 %v362, %v360
    %v457 = vpack.c.b16 %v363, %v361
    %v458 = vpack.c.b16 %v366, %v364
    %v459 = vpack.c.b16 %v367, %v365
    %v460 = vpack.c.b16 %v370, %v368
    %v461 = vpack.c.b16 %v371, %v369
    %v462 = vpack.c.b16 %v374, %v372
    %v463 = vpack.c.b16 %v375, %v373
    %v464 = vpack.c.b16 %v378, %v376
    %v465 = vpack.c.b16 %v379, %v377
    %v466 = vpack.c.b16 %v382, %v380
    %v467 = vpack.c.b16 %v383, %v381
    %v468 = vpack.c.b16 %v386, %v384
    %v469 = vpack.c.b16 %v387, %v385
    %v470 = vpack.c.b16 %v390, %v388
    %v471 = vpack.c.b16 %v391, %v389
    %v472 = vpack.c.b16 %v394, %v392
    %v473 = vpack.c.b16 %v395, %v393
    %v474 = vpack.c.b16 %v398, %v396
    %v475 = vpack.c.b16 %v399, %v397
    %v476 = vpack.c.b16 %v402, %v400
    %v477 = vpack.c.b16 %v403, %v401
    %v478 = vpack.c.b16 %v406, %v404
    %v479 = vpack.c.b16 %v407, %v405
    %v480 = vpack.c.b16 %v410, %v408
    %v481 = vpack.c.b16 %v411, %v409
    %v482 = vpack.c.b16 %v414, %v412
    %v483 = vpack.c.b16 %v415, %v413
    %v484 = vpack.c.b16 %v418, %v416
    %v485 = vpack.c.b16 %v419, %v417
    %v486 = vpack.c.b16 %v422, %v420
    %v487 = vpack.c.b16 %v423, %v421
    %v539 = vunpack.c.l.b16 %v213
    %v540 = vunpack.c.l.b16 %v214
    %v541 = vunpack.c.l.b16 %v215
    %v542 = vunpack.c.l.b16 %v216
    %v543 = vunpack.c.l.b16 %v217
    %v544 = vunpack.c.l.b16 %v218
    %v545 = vunpack.c.l.b16 %v219
    %v546 = vunpack.c.l.b16 %v220
    %v547 = vunpack.c.l.b16 %v221
    %v548 = vunpack.c.l.b16 %v222
    %v549 = vunpack.c.l.b16 %v223
    %v550 = vunpack.c.l.b16 %v224
    %v551 = vunpack.c.l.b16 %v225
    %v552 = vunpack.c.l.b16 %v226
    %v553 = vunpack.c.l.b16 %v227
    %v554 = vunpack.c.l.b16 %v228
    %v555 = vunpack.c.l.b16 %v229
    %v556 = vunpack.c.l.b16 %v230
    %v557 = vunpack.c.l.b16 %v231
    %v558 = vpack.c.b16 %v540, %v539
    %v559 = vpack.c.b16 %v542, %v541
    %v560 = vpack.c.b16 %v544, %v543
    %v561 = vpack.c.b16 %v546, %v545
    %v562 = vpack.c.b16 %v548, %v547
    %v563 = vpack.c.b16 %v550, %v549
    %v564 = vpack.c.b16 %v552, %v551
    %v565 = vpack.c.b16 %v554, %v553
    %v566 = vpack.c.b16 %v556, %v555
    %v567 = vpack.c.b16 %v557, %v557
    %vm577 = vcmask 154624
    %v579 = vsel %vm577, %v425, 0
    %v582 = vsel %vm577, %v427, 0
    %v585 = vsel %vm577, %v429, 0
    %v588 = vsel %vm577, %v431, 0
    %v591 = vsel %vm577, %v433, 0
    %v594 = vsel %vm577, %v435, 0
    %v597 = vsel %vm577, %v437, 0
    %v600 = vsel %vm577, %v439, 0
    %v603 = vsel %vm577, %v441, 0
    %v606 = vsel %vm577, %v443, 0
    %v609 = vsel %vm577, %v445, 0
    %v612 = vsel %vm577, %v447, 0
    %v615 = vsel %vm577, %v449, 0
    %v618 = vsel %vm577, %v451, 0
    %v621 = vsel %vm577, %v453, 0
    %v624 = vsel %vm577, %v455, 0
    %v627 = vsel %vm577, %v457, 0
    %v630 = vsel %vm577, %v459, 0
    %v633 = vsel %vm577, %v461, 0
    %v636 = vsel %vm577, %v463, 0
    %v639 = vsel %vm577, %v465, 0
    %v642 = vsel %vm577, %v467, 0
    %v645 = vsel %vm577, %v469, 0
    %v648 = vsel %vm577, %v471, 0
    %v651 = vsel %vm577, %v473, 0
    %v654 = vsel %vm577, %v475, 0
    %v657 = vsel %vm577, %v477, 0
    %v660 = vsel %vm577, %v479, 0
    %v663 = vsel %vm577, %v481, 0
    %v666 = vsel %vm577, %v483, 0
    %v669 = vsel %vm577, %v485, 0
    %v672 = vsel %vm577, %v487, 0
    %vm674 = vcmask 1040384
    %vm675 = vcmask 1041408
    %v676 = vsel %vm674, 4294967295, 65535
    %v677 = vsel %vm675, %v676, 0
    %v679 = vand.u32 %v567, %v677
    %681 = vmatprep.subr.bf16.mxu0 0
    %682 = vmatpush1.bf16.msra.mxu0 %v565
    %683 = vmatprep.subr.bf16.mxu0 0
    %684 = vmatpush1.bf16.msra.mxu0 %v564
    %685 = vmatprep.subr.bf16.mxu0 0
    %686 = vmatpush1.bf16.msra.mxu0 %v563
    %687 = vmatprep.subr.bf16.mxu0 0
    %688 = vmatpush1.bf16.msra.mxu0 %v562
    %689 = vmatprep.subr.bf16.mxu0 0
    %690 = vmatpush1.bf16.msra.mxu0 %v561
    %691 = vmatprep.subr.bf16.mxu0 0
    %692 = vmatpush1.bf16.msra.mxu0 %v560
    %693 = vmatprep.subr.bf16.mxu0 0
    %694 = vmatpush1.bf16.msra.mxu0 %v559
    %695 = vmatprep.subr.bf16.mxu0 0
    %696 = vmatpush1.bf16.msra.mxu0 %v558
    %697 = vmatprep.subr.bf16.mxu0 0
    %698 = vmatpush2.bf16.msra.mxu0 0
    %699 = vmatprep.subr.bf16.mxu0 0
    %700 = vmatpush2.bf16.msra.mxu0 0
    %701 = vmatprep.subr.bf16.mxu0 0
    %702 = vmatpush2.bf16.msra.mxu0 0
    %703 = vmatprep.subr.bf16.mxu0 0
    %704 = vmatpush2.bf16.msra.mxu0 0
    %705 = vmatprep.subr.bf16.mxu0 0
    %706 = vmatpush2.bf16.msra.mxu0 0
    %707 = vmatprep.subr.bf16.mxu0 0
    %708 = vmatpush2.bf16.msra.mxu0 0
    %709 = vmatprep.subr.bf16.mxu0 0
    %710 = vmatpush2.bf16.msra.mxu0 %v679
    %711 = vmatprep.subr.bf16.mxu0 0
    %712 = vmatpush2.bf16.msra.mxu0 %v566
    %713 = vmatprep.mubr.bf16.mxu0 %v579
    %714 = vmatmul.mubr.bf16.gmra.mxu0 %v424
    %v715 = vpop.f32.mrf.mxu0
    %v716 = vadd.f32 0.0, %v715
    %v717 = vpop.f32.mrf.mxu0
    %v718 = vpop.f32.mrf.mxu0
    %v719 = vadd.f32 0.0, %v718
    %v720 = vpop.f32.mrf.mxu0
    %721 = vmatprep.mubr.bf16.mxu0 %v582
    %722 = vmatmul.mubr.bf16.gmra.mxu0 %v426
    %v723 = vpop.f32.mrf.mxu0
    %v724 = vadd.f32 0.0, %v723
    %v725 = vpop.f32.mrf.mxu0
    %v726 = vpop.f32.mrf.mxu0
    %v727 = vadd.f32 0.0, %v726
    %v728 = vpop.f32.mrf.mxu0
    %729 = vmatprep.mubr.bf16.mxu0 %v585
    %730 = vmatmul.mubr.bf16.gmra.mxu0 %v428
    %v731 = vpop.f32.mrf.mxu0
    %v732 = vadd.f32 0.0, %v731
    %v733 = vpop.f32.mrf.mxu0
    %v734 = vpop.f32.mrf.mxu0
    %v735 = vadd.f32 0.0, %v734
    %v736 = vpop.f32.mrf.mxu0
    %737 = vmatprep.mubr.bf16.mxu0 %v588
    %738 = vmatmul.mubr.bf16.gmra.mxu0 %v430
    %v739 = vpop.f32.mrf.mxu0
    %v740 = vadd.f32 0.0, %v739
    %v741 = vpop.f32.mrf.mxu0
    %v742 = vpop.f32.mrf.mxu0
    %v743 = vadd.f32 0.0, %v742
    %v744 = vpop.f32.mrf.mxu0
    %745 = vmatprep.mubr.bf16.mxu0 %v591
    %746 = vmatmul.mubr.bf16.gmra.mxu0 %v432
    %v747 = vpop.f32.mrf.mxu0
    %v748 = vadd.f32 0.0, %v747
    %v749 = vpop.f32.mrf.mxu0
    %v750 = vpop.f32.mrf.mxu0
    %v751 = vadd.f32 0.0, %v750
    %v752 = vpop.f32.mrf.mxu0
    %753 = vmatprep.mubr.bf16.mxu0 %v594
    %754 = vmatmul.mubr.bf16.gmra.mxu0 %v434
    %v755 = vpop.f32.mrf.mxu0
    %v756 = vadd.f32 0.0, %v755
    %v757 = vpop.f32.mrf.mxu0
    %v758 = vpop.f32.mrf.mxu0
    %v759 = vadd.f32 0.0, %v758
    %v760 = vpop.f32.mrf.mxu0
    %761 = vmatprep.mubr.bf16.mxu0 %v597
    %762 = vmatmul.mubr.bf16.gmra.mxu0 %v436
    %v763 = vpop.f32.mrf.mxu0
    %v764 = vadd.f32 0.0, %v763
    %v765 = vpop.f32.mrf.mxu0
    %v766 = vpop.f32.mrf.mxu0
    %v767 = vadd.f32 0.0, %v766
    %v768 = vpop.f32.mrf.mxu0
    %769 = vmatprep.mubr.bf16.mxu0 %v600
    %770 = vmatmul.mubr.bf16.gmra.mxu0 %v438
    %v771 = vpop.f32.mrf.mxu0
    %v772 = vadd.f32 0.0, %v771
    %v773 = vpop.f32.mrf.mxu0
    %v774 = vpop.f32.mrf.mxu0
    %v775 = vadd.f32 0.0, %v774
    %v776 = vpop.f32.mrf.mxu0
    %777 = vmatprep.mubr.bf16.mxu0 %v603
    %778 = vmatmul.mubr.bf16.gmra.mxu0 %v440
    %v779 = vpop.f32.mrf.mxu0
    %v780 = vadd.f32 0.0, %v779
    %v781 = vpop.f32.mrf.mxu0
    %v782 = vpop.f32.mrf.mxu0
    %v783 = vadd.f32 0.0, %v782
    %v784 = vpop.f32.mrf.mxu0
    %785 = vmatprep.mubr.bf16.mxu0 %v606
    %786 = vmatmul.mubr.bf16.gmra.mxu0 %v442
    %v787 = vpop.f32.mrf.mxu0
    %v788 = vadd.f32 0.0, %v787
    %v789 = vpop.f32.mrf.mxu0
    %v790 = vpop.f32.mrf.mxu0
    %v791 = vadd.f32 0.0, %v790
    %v792 = vpop.f32.mrf.mxu0
    %793 = vmatprep.mubr.bf16.mxu0 %v609
    %794 = vmatmul.mubr.bf16.gmra.mxu0 %v444
    %v795 = vpop.f32.mrf.mxu0
    %v796 = vadd.f32 0.0, %v795
    %v797 = vpop.f32.mrf.mxu0
    %v798 = vpop.f32.mrf.mxu0
    %v799 = vadd.f32 0.0, %v798
    %v800 = vpop.f32.mrf.mxu0
    %801 = vmatprep.mubr.bf16.mxu0 %v612
    %802 = vmatmul.mubr.bf16.gmra.mxu0 %v446
    %v803 = vpop.f32.mrf.mxu0
    %v804 = vadd.f32 0.0, %v803
    %v805 = vpop.f32.mrf.mxu0
    %v806 = vpop.f32.mrf.mxu0
    %v807 = vadd.f32 0.0, %v806
    %v808 = vpop.f32.mrf.mxu0
    %809 = vmatprep.mubr.bf16.mxu0 %v615
    %810 = vmatmul.mubr.bf16.gmra.mxu0 %v448
    %v811 = vpop.f32.mrf.mxu0
    %v812 = vadd.f32 0.0, %v811
    %v813 = vpop.f32.mrf.mxu0
    %v814 = vpop.f32.mrf.mxu0
    %v815 = vadd.f32 0.0, %v814
    %v816 = vpop.f32.mrf.mxu0
    %817 = vmatprep.mubr.bf16.mxu0 %v618
    %818 = vmatmul.mubr.bf16.gmra.mxu0 %v450
    %v819 = vpop.f32.mrf.mxu0
    %v820 = vadd.f32 0.0, %v819
    %v821 = vpop.f32.mrf.mxu0
    %v822 = vpop.f32.mrf.mxu0
    %v823 = vadd.f32 0.0, %v822
    %v824 = vpop.f32.mrf.mxu0
    %825 = vmatprep.mubr.bf16.mxu0 %v621
    %826 = vmatmul.mubr.bf16.gmra.mxu0 %v452
    %v827 = vpop.f32.mrf.mxu0
    %v828 = vadd.f32 0.0, %v827
    %v829 = vpop.f32.mrf.mxu0
    %v830 = vpop.f32.mrf.mxu0
    %v831 = vadd.f32 0.0, %v830
    %v832 = vpop.f32.mrf.mxu0
    %833 = vmatprep.mubr.bf16.mxu0 %v624
    %834 = vmatmul.mubr.bf16.gmra.mxu0 %v454
    %v835 = vpop.f32.mrf.mxu0
    %v836 = vadd.f32 0.0, %v835
    %v837 = vpop.f32.mrf.mxu0
    %v838 = vpop.f32.mrf.mxu0
    %v839 = vadd.f32 0.0, %v838
    %v840 = vpop.f32.mrf.mxu0
    %841 = vmatprep.mubr.bf16.mxu0 %v627
    %842 = vmatmul.mubr.bf16.gmra.mxu0 %v456
    %v843 = vpop.f32.mrf.mxu0
    %v844 = vadd.f32 0.0, %v843
    %v845 = vpop.f32.mrf.mxu0
    %v846 = vpop.f32.mrf.mxu0
    %v847 = vadd.f32 0.0, %v846
    %v848 = vpop.f32.mrf.mxu0
    %849 = vmatprep.mubr.bf16.mxu0 %v630
    %850 = vmatmul.mubr.bf16.gmra.mxu0 %v458
    %v851 = vpop.f32.mrf.mxu0
    %v852 = vadd.f32 0.0, %v851
    %v853 = vpop.f32.mrf.mxu0
    %v854 = vpop.f32.mrf.mxu0
    %v855 = vadd.f32 0.0, %v854
    %v856 = vpop.f32.mrf.mxu0
    %857 = vmatprep.mubr.bf16.mxu0 %v633
    %858 = vmatmul.mubr.bf16.gmra.mxu0 %v460
    %v859 = vpop.f32.mrf.mxu0
    %v860 = vadd.f32 0.0, %v859
    %v861 = vpop.f32.mrf.mxu0
    %v862 = vpop.f32.mrf.mxu0
    %v863 = vadd.f32 0.0, %v862
    %v864 = vpop.f32.mrf.mxu0
    %865 = vmatprep.mubr.bf16.mxu0 %v636
    %866 = vmatmul.mubr.bf16.gmra.mxu0 %v462
    %v867 = vpop.f32.mrf.mxu0
    %v868 = vadd.f32 0.0, %v867
    %v869 = vpop.f32.mrf.mxu0
    %v870 = vpop.f32.mrf.mxu0
    %v871 = vadd.f32 0.0, %v870
    %v872 = vpop.f32.mrf.mxu0
    %873 = vmatprep.mubr.bf16.mxu0 %v639
    %874 = vmatmul.mubr.bf16.gmra.mxu0 %v464
    %v875 = vpop.f32.mrf.mxu0
    %v876 = vadd.f32 0.0, %v875
    %v877 = vpop.f32.mrf.mxu0
    %v878 = vpop.f32.mrf.mxu0
    %v879 = vadd.f32 0.0, %v878
    %v880 = vpop.f32.mrf.mxu0
    %881 = vmatprep.mubr.bf16.mxu0 %v642
    %882 = vmatmul.mubr.bf16.gmra.mxu0 %v466
    %v883 = vpop.f32.mrf.mxu0
    %v884 = vadd.f32 0.0, %v883
    %v885 = vpop.f32.mrf.mxu0
    %v886 = vpop.f32.mrf.mxu0
    %v887 = vadd.f32 0.0, %v886
    %v888 = vpop.f32.mrf.mxu0
    %889 = vmatprep.mubr.bf16.mxu0 %v645
    %890 = vmatmul.mubr.bf16.gmra.mxu0 %v468
    %v891 = vpop.f32.mrf.mxu0
    %v892 = vadd.f32 0.0, %v891
    %v893 = vpop.f32.mrf.mxu0
    %v894 = vpop.f32.mrf.mxu0
    %v895 = vadd.f32 0.0, %v894
    %v896 = vpop.f32.mrf.mxu0
    %897 = vmatprep.mubr.bf16.mxu0 %v648
    %898 = vmatmul.mubr.bf16.gmra.mxu0 %v470
    %v899 = vpop.f32.mrf.mxu0
    %v900 = vadd.f32 0.0, %v899
    %v901 = vpop.f32.mrf.mxu0
    %v902 = vpop.f32.mrf.mxu0
    %v903 = vadd.f32 0.0, %v902
    %v904 = vpop.f32.mrf.mxu0
    %905 = vmatprep.mubr.bf16.mxu0 %v651
    %906 = vmatmul.mubr.bf16.gmra.mxu0 %v472
    %v907 = vpop.f32.mrf.mxu0
    %v908 = vadd.f32 0.0, %v907
    %v909 = vpop.f32.mrf.mxu0
    %v910 = vpop.f32.mrf.mxu0
    %v911 = vadd.f32 0.0, %v910
    %v912 = vpop.f32.mrf.mxu0
    %913 = vmatprep.mubr.bf16.mxu0 %v654
    %914 = vmatmul.mubr.bf16.gmra.mxu0 %v474
    %v915 = vpop.f32.mrf.mxu0
    %v916 = vadd.f32 0.0, %v915
    %v917 = vpop.f32.mrf.mxu0
    %v918 = vpop.f32.mrf.mxu0
    %v919 = vadd.f32 0.0, %v918
    %v920 = vpop.f32.mrf.mxu0
    %921 = vmatprep.mubr.bf16.mxu0 %v657
    %922 = vmatmul.mubr.bf16.gmra.mxu0 %v476
    %v923 = vpop.f32.mrf.mxu0
    %v924 = vadd.f32 0.0, %v923
    %v925 = vpop.f32.mrf.mxu0
    %v926 = vpop.f32.mrf.mxu0
    %v927 = vadd.f32 0.0, %v926
    %v928 = vpop.f32.mrf.mxu0
    %929 = vmatprep.mubr.bf16.mxu0 %v660
    %930 = vmatmul.mubr.bf16.gmra.mxu0 %v478
    %v931 = vpop.f32.mrf.mxu0
    %v932 = vadd.f32 0.0, %v931
    %v933 = vpop.f32.mrf.mxu0
    %v934 = vpop.f32.mrf.mxu0
    %v935 = vadd.f32 0.0, %v934
    %v936 = vpop.f32.mrf.mxu0
    %937 = vmatprep.mubr.bf16.mxu0 %v663
    %938 = vmatmul.mubr.bf16.gmra.mxu0 %v480
    %v939 = vpop.f32.mrf.mxu0
    %v940 = vadd.f32 0.0, %v939
    %v941 = vpop.f32.mrf.mxu0
    %v942 = vpop.f32.mrf.mxu0
    %v943 = vadd.f32 0.0, %v942
    %v944 = vpop.f32.mrf.mxu0
    %945 = vmatprep.mubr.bf16.mxu0 %v666
    %946 = vmatmul.mubr.bf16.gmra.mxu0 %v482
    %v947 = vpop.f32.mrf.mxu0
    %v948 = vadd.f32 0.0, %v947
    %v949 = vpop.f32.mrf.mxu0
    %v950 = vpop.f32.mrf.mxu0
    %v951 = vadd.f32 0.0, %v950
    %v952 = vpop.f32.mrf.mxu0
    %953 = vmatprep.mubr.bf16.mxu0 %v669
    %954 = vmatmul.mubr.bf16.gmra.mxu0 %v484
    %v955 = vpop.f32.mrf.mxu0
    %v956 = vadd.f32 0.0, %v955
    %v957 = vpop.f32.mrf.mxu0
    %v958 = vpop.f32.mrf.mxu0
    %v959 = vadd.f32 0.0, %v958
    %v960 = vpop.f32.mrf.mxu0
    %961 = vmatprep.mubr.bf16.mxu0 %v672
    %962 = vmatmul.mubr.bf16.gmra.mxu0 %v486
    %v963 = vpop.f32.mrf.mxu0
    %v964 = vadd.f32 0.0, %v963
    %v965 = vpop.f32.mrf.mxu0
    %v966 = vpop.f32.mrf.mxu0
    %v967 = vadd.f32 0.0, %v966
    %v968 = vpop.f32.mrf.mxu0
    %969 = vdwg.mxu0
    %v970 = vadd.f32 %v85, %v716
    %v971 = vadd.f32 %v86, %v719
    %v972 = vadd.f32 %v87, %v724
    %v973 = vadd.f32 %v88, %v727
    %v974 = vadd.f32 %v89, %v732
    %v975 = vadd.f32 %v90, %v735
    %v976 = vadd.f32 %v91, %v740
    %v977 = vadd.f32 %v92, %v743
    %v978 = vadd.f32 %v93, %v748
    %v979 = vadd.f32 %v94, %v751
    %v980 = vadd.f32 %v95, %v756
    %v981 = vadd.f32 %v96, %v759
    %v982 = vadd.f32 %v97, %v764
    %v983 = vadd.f32 %v98, %v767
    %v984 = vadd.f32 %v99, %v772
    %v985 = vadd.f32 %v100, %v775
    %v986 = vadd.f32 %v101, %v780
    %v987 = vadd.f32 %v102, %v783
    %v988 = vadd.f32 %v103, %v788
    %v989 = vadd.f32 %v104, %v791
    %v990 = vadd.f32 %v105, %v796
    %v991 = vadd.f32 %v106, %v799
    %v992 = vadd.f32 %v107, %v804
    %v993 = vadd.f32 %v108, %v807
    %v994 = vadd.f32 %v109, %v812
    %v995 = vadd.f32 %v110, %v815
    %v996 = vadd.f32 %v111, %v820
    %v997 = vadd.f32 %v112, %v823
    %v998 = vadd.f32 %v113, %v828
    %v999 = vadd.f32 %v114, %v831
    %v1000 = vadd.f32 %v115, %v836
    %v1001 = vadd.f32 %v116, %v839
    %v1002 = vadd.f32 %v117, %v844
    %v1003 = vadd.f32 %v118, %v847
    %v1004 = vadd.f32 %v119, %v852
    %v1005 = vadd.f32 %v120, %v855
    %v1006 = vadd.f32 %v121, %v860
    %v1007 = vadd.f32 %v122, %v863
    %v1008 = vadd.f32 %v123, %v868
    %v1009 = vadd.f32 %v124, %v871
    %v1010 = vadd.f32 %v125, %v876
    %v1011 = vadd.f32 %v126, %v879
    %v1012 = vadd.f32 %v127, %v884
    %v1013 = vadd.f32 %v128, %v887
    %v1014 = vadd.f32 %v129, %v892
    %v1015 = vadd.f32 %v130, %v895
    %v1016 = vadd.f32 %v131, %v900
    %v1017 = vadd.f32 %v132, %v903
    %v1018 = vadd.f32 %v133, %v908
    %v1019 = vadd.f32 %v134, %v911
    %v1020 = vadd.f32 %v135, %v916
    %v1021 = vadd.f32 %v136, %v919
    %v1022 = vadd.f32 %v137, %v924
    %v1023 = vadd.f32 %v138, %v927
    %v1024 = vadd.f32 %v139, %v932
    %v1025 = vadd.f32 %v140, %v935
    %v1026 = vadd.f32 %v141, %v940
    %v1027 = vadd.f32 %v142, %v943
    %v1028 = vadd.f32 %v143, %v948
    %v1029 = vadd.f32 %v144, %v951
    %v1030 = vadd.f32 %v145, %v956
    %v1031 = vadd.f32 %v146, %v959
    %v1032 = vadd.f32 %v147, %v964
    %v1033 = vadd.f32 %v148, %v967
    %vm1034 = vcmask 523264
    %1035 = vst.msk [vmem:[#allocation2] sm:$0xff] %vm1034, %v970
    %1036 = vst.msk [vmem:[#allocation2 + $0x8] sm:$0xff] %vm1034, %v971
    %1037 = vst.msk [vmem:[#allocation2 + $0x10] sm:$0xff] %vm1034, %v972
    %1038 = vst.msk [vmem:[#allocation2 + $0x18] sm:$0xff] %vm1034, %v973
    %1039 = vst.msk [vmem:[#allocation2 + $0x20] sm:$0xff] %vm1034, %v974
    %1040 = vst.msk [vmem:[#allocation2 + $0x28] sm:$0xff] %vm1034, %v975
    %1041 = vst.msk [vmem:[#allocation2 + $0x30] sm:$0xff] %vm1034, %v976
    %1042 = vst.msk [vmem:[#allocation2 + $0x38] sm:$0xff] %vm1034, %v977
    %1043 = vst.msk [vmem:[#allocation2 + $0x40] sm:$0xff] %vm1034, %v978
    %1044 = vst.msk [vmem:[#allocation2 + $0x48] sm:$0xff] %vm1034, %v979
    %1045 = vst.msk [vmem:[#allocation2 + $0x50] sm:$0xff] %vm1034, %v980
    %1046 = vst.msk [vmem:[#allocation2 + $0x58] sm:$0xff] %vm1034, %v981
    %1047 = vst.msk [vmem:[#allocation2 + $0x60] sm:$0xff] %vm1034, %v982
    %1048 = vst.msk [vmem:[#allocation2 + $0x68] sm:$0xff] %vm1034, %v983
    %1049 = vst.msk [vmem:[#allocation2 + $0x70] sm:$0xff] %vm1034, %v984
    %1050 = vst.msk [vmem:[#allocation2 + $0x78] sm:$0xff] %vm1034, %v985
    %1051 = vst.msk [vmem:[#allocation2 + $0x80] sm:$0xff] %vm1034, %v986
    %1052 = vst.msk [vmem:[#allocation2 + $0x88] sm:$0xff] %vm1034, %v987
    %1053 = vst.msk [vmem:[#allocation2 + $0x90] sm:$0xff] %vm1034, %v988
    %1054 = vst.msk [vmem:[#allocation2 + $0x98] sm:$0xff] %vm1034, %v989
    %1055 = vst.msk [vmem:[#allocation2 + $0xa0] sm:$0xff] %vm1034, %v990
    %1056 = vst.msk [vmem:[#allocation2 + $0xa8] sm:$0xff] %vm1034, %v991
    %1057 = vst.msk [vmem:[#allocation2 + $0xb0] sm:$0xff] %vm1034, %v992
    %1058 = vst.msk [vmem:[#allocation2 + $0xb8] sm:$0xff] %vm1034, %v993
    %1059 = vst.msk [vmem:[#allocation2 + $0xc0] sm:$0xff] %vm1034, %v994
    %1060 = vst.msk [vmem:[#allocation2 + $0xc8] sm:$0xff] %vm1034, %v995
    %1061 = vst.msk [vmem:[#allocation2 + $0xd0] sm:$0xff] %vm1034, %v996
    %1062 = vst.msk [vmem:[#allocation2 + $0xd8] sm:$0xff] %vm1034, %v997
    %1063 = vst.msk [vmem:[#allocation2 + $0xe0] sm:$0xff] %vm1034, %v998
    %1064 = vst.msk [vmem:[#allocation2 + $0xe8] sm:$0xff] %vm1034, %v999
    %1065 = vst.msk [vmem:[#allocation2 + $0xf0] sm:$0xff] %vm1034, %v1000
    %1066 = vst.msk [vmem:[#allocation2 + $0xf8] sm:$0xff] %vm1034, %v1001
    %1067 = vst.msk [vmem:[#allocation2 + $0x100] sm:$0xff] %vm1034, %v1002
    %1068 = vst.msk [vmem:[#allocation2 + $0x108] sm:$0xff] %vm1034, %v1003
    %1069 = vst.msk [vmem:[#allocation2 + $0x110] sm:$0xff] %vm1034, %v1004
    %1070 = vst.msk [vmem:[#allocation2 + $0x118] sm:$0xff] %vm1034, %v1005
    %1071 = vst.msk [vmem:[#allocation2 + $0x120] sm:$0xff] %vm1034, %v1006
    %1072 = vst.msk [vmem:[#allocation2 + $0x128] sm:$0xff] %vm1034, %v1007
    %1073 = vst.msk [vmem:[#allocation2 + $0x130] sm:$0xff] %vm1034, %v1008
    %1074 = vst.msk [vmem:[#allocation2 + $0x138] sm:$0xff] %vm1034, %v1009
    %1075 = vst.msk [vmem:[#allocation2 + $0x140] sm:$0xff] %vm1034, %v1010
    %1076 = vst.msk [vmem:[#allocation2 + $0x148] sm:$0xff] %vm1034, %v1011
    %1077 = vst.msk [vmem:[#allocation2 + $0x150] sm:$0xff] %vm1034, %v1012
    %1078 = vst.msk [vmem:[#allocation2 + $0x158] sm:$0xff] %vm1034, %v1013
    %1079 = vst.msk [vmem:[#allocation2 + $0x160] sm:$0xff] %vm1034, %v1014
    %1080 = vst.msk [vmem:[#allocation2 + $0x168] sm:$0xff] %vm1034, %v1015
    %1081 = vst.msk [vmem:[#allocation2 + $0x170] sm:$0xff] %vm1034, %v1016
    %1082 = vst.msk [vmem:[#allocation2 + $0x178] sm:$0xff] %vm1034, %v1017
    %1083 = vst.msk [vmem:[#allocation2 + $0x180] sm:$0xff] %vm1034, %v1018
    %1084 = vst.msk [vmem:[#allocation2 + $0x188] sm:$0xff] %vm1034, %v1019
    %1085 = vst.msk [vmem:[#allocation2 + $0x190] sm:$0xff] %vm1034, %v1020
    %1086 = vst.msk [vmem:[#allocation2 + $0x198] sm:$0xff] %vm1034, %v1021
    %1087 = vst.msk [vmem:[#allocation2 + $0x1a0] sm:$0xff] %vm1034, %v1022
    %1088 = vst.msk [vmem:[#allocation2 + $0x1a8] sm:$0xff] %vm1034, %v1023
    %1089 = vst.msk [vmem:[#allocation2 + $0x1b0] sm:$0xff] %vm1034, %v1024
    %1090 = vst.msk [vmem:[#allocation2 + $0x1b8] sm:$0xff] %vm1034, %v1025
    %1091 = vst.msk [vmem:[#allocation2 + $0x1c0] sm:$0xff] %vm1034, %v1026
    %1092 = vst.msk [vmem:[#allocation2 + $0x1c8] sm:$0xff] %vm1034, %v1027
    %1093 = vst.msk [vmem:[#allocation2 + $0x1d0] sm:$0xff] %vm1034, %v1028
    %1094 = vst.msk [vmem:[#allocation2 + $0x1d8] sm:$0xff] %vm1034, %v1029
    %1095 = vst.msk [vmem:[#allocation2 + $0x1e0] sm:$0xff] %vm1034, %v1030
    %1096 = vst.msk [vmem:[#allocation2 + $0x1e8] sm:$0xff] %vm1034, %v1031
    %1097 = vst.msk [vmem:[#allocation2 + $0x1f0] sm:$0xff] %vm1034, %v1032
    %1098 = vst.msk [vmem:[#allocation2 + $0x1f8] sm:$0xff] %vm1034, %v1033
    // Predicated region
    $region18: #{_conv2d_nhwc.1} parent=1 // pred_check
      %p1099 = pneg %p16
    $region19: #{_conv2d_nhwc.1} parent=1 // pred_check_branch
      %1101 = sbr.rel (%p1099) target = $region21
    $region20: #{_conv2d_nhwc.1} parent=1 // pred_region
      %v1102 = vld [vmem:[#allocation2] sm:$0xff]
      %v1103 = vld [vmem:[#allocation2 + $0x8] sm:$0xff]
      %v1104 = vld [vmem:[#allocation2 + $0x10] sm:$0xff]
      %v1105 = vld [vmem:[#allocation2 + $0x18] sm:$0xff]
      %v1106 = vld [vmem:[#allocation2 + $0x20] sm:$0xff]
      %v1107 = vld [vmem:[#allocation2 + $0x28] sm:$0xff]
      %v1108 = vld [vmem:[#allocation2 + $0x30] sm:$0xff]
      %v1109 = vld [vmem:[#allocation2 + $0x38] sm:$0xff]
      %v1110 = vld [vmem:[#allocation2 + $0x40] sm:$0xff]
      %v1111 = vld [vmem:[#allocation2 + $0x48] sm:$0xff]
      %v1112 = vld [vmem:[#allocation2 + $0x50] sm:$0xff]
      %v1113 = vld [vmem:[#allocation2 + $0x58] sm:$0xff]
      %v1114 = vld [vmem:[#allocation2 + $0x60] sm:$0xff]
      %v1115 = vld [vmem:[#allocation2 + $0x68] sm:$0xff]
      %v1116 = vld [vmem:[#allocation2 + $0x70] sm:$0xff]
      %v1117 = vld [vmem:[#allocation2 + $0x78] sm:$0xff]
      %v1118 = vld [vmem:[#allocation2 + $0x80] sm:$0xff]
      %v1119 = vld [vmem:[#allocation2 + $0x88] sm:$0xff]
      %v1120 = vld [vmem:[#allocation2 + $0x90] sm:$0xff]
      %v1121 = vld [vmem:[#allocation2 + $0x98] sm:$0xff]
      %v1122 = vld [vmem:[#allocation2 + $0xa0] sm:$0xff]
      %v1123 = vld [vmem:[#allocation2 + $0xa8] sm:$0xff]
      %v1124 = vld [vmem:[#allocation2 + $0xb0] sm:$0xff]
      %v1125 = vld [vmem:[#allocation2 + $0xb8] sm:$0xff]
      %v1126 = vld [vmem:[#allocation2 + $0xc0] sm:$0xff]
      %v1127 = vld [vmem:[#allocation2 + $0xc8] sm:$0xff]
      %v1128 = vld [vmem:[#allocation2 + $0xd0] sm:$0xff]
      %v1129 = vld [vmem:[#allocation2 + $0xd8] sm:$0xff]
      %v1130 = vld [vmem:[#allocation2 + $0xe0] sm:$0xff]
      %v1131 = vld [vmem:[#allocation2 + $0xe8] sm:$0xff]
      %v1132 = vld [vmem:[#allocation2 + $0xf0] sm:$0xff]
      %v1133 = vld [vmem:[#allocation2 + $0xf8] sm:$0xff]
      %v1134 = vld [vmem:[#allocation2 + $0x100] sm:$0xff]
      %v1135 = vld [vmem:[#allocation2 + $0x108] sm:$0xff]
      %v1136 = vld [vmem:[#allocation2 + $0x110] sm:$0xff]
      %v1137 = vld [vmem:[#allocation2 + $0x118] sm:$0xff]
      %v1138 = vld [vmem:[#allocation2 + $0x120] sm:$0xff]
      %v1139 = vld [vmem:[#allocation2 + $0x128] sm:$0xff]
      %v1140 = vld [vmem:[#allocation2 + $0x130] sm:$0xff]
      %v1141 = vld [vmem:[#allocation2 + $0x138] sm:$0xff]
      %v1142 = vld [vmem:[#allocation2 + $0x140] sm:$0xff]
      %v1143 = vld [vmem:[#allocation2 + $0x148] sm:$0xff]
      %v1144 = vld [vmem:[#allocation2 + $0x150] sm:$0xff]
      %v1145 = vld [vmem:[#allocation2 + $0x158] sm:$0xff]
      %v1146 = vld [vmem:[#allocation2 + $0x160] sm:$0xff]
      %v1147 = vld [vmem:[#allocation2 + $0x168] sm:$0xff]
      %v1148 = vld [vmem:[#allocation2 + $0x170] sm:$0xff]
      %v1149 = vld [vmem:[#allocation2 + $0x178] sm:$0xff]
      %v1150 = vld [vmem:[#allocation2 + $0x180] sm:$0xff]
      %v1151 = vld [vmem:[#allocation2 + $0x188] sm:$0xff]
      %v1152 = vld [vmem:[#allocation2 + $0x190] sm:$0xff]
      %v1153 = vld [vmem:[#allocation2 + $0x198] sm:$0xff]
      %v1154 = vld [vmem:[#allocation2 + $0x1a0] sm:$0xff]
      %v1155 = vld [vmem:[#allocation2 + $0x1a8] sm:$0xff]
      %v1156 = vld [vmem:[#allocation2 + $0x1b0] sm:$0xff]
      %v1157 = vld [vmem:[#allocation2 + $0x1b8] sm:$0xff]
      %v1158 = vld [vmem:[#allocation2 + $0x1c0] sm:$0xff]
      %v1159 = vld [vmem:[#allocation2 + $0x1c8] sm:$0xff]
      %v1160 = vld [vmem:[#allocation2 + $0x1d0] sm:$0xff]
      %v1161 = vld [vmem:[#allocation2 + $0x1d8] sm:$0xff]
      %v1162 = vld [vmem:[#allocation2 + $0x1e0] sm:$0xff]
      %v1163 = vld [vmem:[#allocation2 + $0x1e8] sm:$0xff]
      %v1164 = vld [vmem:[#allocation2 + $0x1f0] sm:$0xff]
      %v1165 = vld [vmem:[#allocation2 + $0x1f8] sm:$0xff]
      %v1166 = vld [vmem:[%s2] sm:$0x1]
      %v1168 = vlaneseq
      %v1169 = vshrl.u32 %v1168, 7
      %v1170 = vsub.s32 0, %v1169
      %v1171 = vrot.slane %v1166, %v1170
      %v1173 = vadd.f32 %v1102, %v1171
      %v1174 = vadd.f32 %v1103, %v1171
      %v1175 = vadd.f32 %v1104, %v1171
      %v1176 = vadd.f32 %v1105, %v1171
      %v1177 = vadd.f32 %v1106, %v1171
      %v1178 = vadd.f32 %v1107, %v1171
      %v1179 = vadd.f32 %v1108, %v1171
      %v1180 = vadd.f32 %v1109, %v1171
      %v1181 = vadd.f32 %v1110, %v1171
      %v1182 = vadd.f32 %v1111, %v1171
      %v1183 = vadd.f32 %v1112, %v1171
      %v1184 = vadd.f32 %v1113, %v1171
      %v1185 = vadd.f32 %v1114, %v1171
      %v1186 = vadd.f32 %v1115, %v1171
      %v1187 = vadd.f32 %v1116, %v1171
      %v1188 = vadd.f32 %v1117, %v1171
      %v1189 = vadd.f32 %v1118, %v1171
      %v1190 = vadd.f32 %v1119, %v1171
      %v1191 = vadd.f32 %v1120, %v1171
      %v1192 = vadd.f32 %v1121, %v1171
      %v1193 = vadd.f32 %v1122, %v1171
      %v1194 = vadd.f32 %v1123, %v1171
      %v1195 = vadd.f32 %v1124, %v1171
      %v1196 = vadd.f32 %v1125, %v1171
      %v1197 = vadd.f32 %v1126, %v1171
      %v1198 = vadd.f32 %v1127, %v1171
      %v1199 = vadd.f32 %v1128, %v1171
      %v1200 = vadd.f32 %v1129, %v1171
      %v1201 = vadd.f32 %v1130, %v1171
      %v1202 = vadd.f32 %v1131, %v1171
      %v1203 = vadd.f32 %v1132, %v1171
      %v1204 = vadd.f32 %v1133, %v1171
      %v1205 = vadd.f32 %v1134, %v1171
      %v1206 = vadd.f32 %v1135, %v1171
      %v1207 = vadd.f32 %v1136, %v1171
      %v1208 = vadd.f32 %v1137, %v1171
      %v1209 = vadd.f32 %v1138, %v1171
      %v1210 = vadd.f32 %v1139, %v1171
      %v1211 = vadd.f32 %v1140, %v1171
      %v1212 = vadd.f32 %v1141, %v1171
      %v1213 = vadd.f32 %v1142, %v1171
      %v1214 = vadd.f32 %v1143, %v1171
      %v1215 = vadd.f32 %v1144, %v1171
      %v1216 = vadd.f32 %v1145, %v1171
      %v1217 = vadd.f32 %v1146, %v1171
      %v1218 = vadd.f32 %v1147, %v1171
      %v1219 = vadd.f32 %v1148, %v1171
      %v1220 = vadd.f32 %v1149, %v1171
      %v1221 = vadd.f32 %v1150, %v1171
      %v1222 = vadd.f32 %v1151, %v1171
      %v1223 = vadd.f32 %v1152, %v1171
      %v1224 = vadd.f32 %v1153, %v1171
      %v1225 = vadd.f32 %v1154, %v1171
      %v1226 = vadd.f32 %v1155, %v1171
      %v1227 = vadd.f32 %v1156, %v1171
      %v1228 = vadd.f32 %v1157, %v1171
      %v1229 = vadd.f32 %v1158, %v1171
      %v1230 = vadd.f32 %v1159, %v1171
      %v1231 = vadd.f32 %v1160, %v1171
      %v1232 = vadd.f32 %v1161, %v1171
      %v1233 = vadd.f32 %v1162, %v1171
      %v1234 = vadd.f32 %v1163, %v1171
      %v1235 = vadd.f32 %v1164, %v1171
      %v1236 = vadd.f32 %v1165, %v1171
      %v1237 = vmax.f32 %v1173, 0.0
      %v1238 = vmax.f32 %v1174, 0.0
      %v1239 = vmax.f32 %v1175, 0.0
      %v1240 = vmax.f32 %v1176, 0.0
      %v1241 = vmax.f32 %v1177, 0.0
      %v1242 = vmax.f32 %v1178, 0.0
      %v1243 = vmax.f32 %v1179, 0.0
      %v1244 = vmax.f32 %v1180, 0.0
      %v1245 = vmax.f32 %v1181, 0.0
      %v1246 = vmax.f32 %v1182, 0.0
      %v1247 = vmax.f32 %v1183, 0.0
      %v1248 = vmax.f32 %v1184, 0.0
      %v1249 = vmax.f32 %v1185, 0.0
      %v1250 = vmax.f32 %v1186, 0.0
      %v1251 = vmax.f32 %v1187, 0.0
      %v1252 = vmax.f32 %v1188, 0.0
      %v1253 = vmax.f32 %v1189, 0.0
      %v1254 = vmax.f32 %v1190, 0.0
      %v1255 = vmax.f32 %v1191, 0.0
      %v1256 = vmax.f32 %v1192, 0.0
      %v1257 = vmax.f32 %v1193, 0.0
      %v1258 = vmax.f32 %v1194, 0.0
      %v1259 = vmax.f32 %v1195, 0.0
      %v1260 = vmax.f32 %v1196, 0.0
      %v1261 = vmax.f32 %v1197, 0.0
      %v1262 = vmax.f32 %v1198, 0.0
      %v1263 = vmax.f32 %v1199, 0.0
      %v1264 = vmax.f32 %v1200, 0.0
      %v1265 = vmax.f32 %v1201, 0.0
      %v1266 = vmax.f32 %v1202, 0.0
      %v1267 = vmax.f32 %v1203, 0.0
      %v1268 = vmax.f32 %v1204, 0.0
      %v1269 = vmax.f32 %v1205, 0.0
      %v1270 = vmax.f32 %v1206, 0.0
      %v1271 = vmax.f32 %v1207, 0.0
      %v1272 = vmax.f32 %v1208, 0.0
      %v1273 = vmax.f32 %v1209, 0.0
      %v1274 = vmax.f32 %v1210, 0.0
      %v1275 = vmax.f32 %v1211, 0.0
      %v1276 = vmax.f32 %v1212, 0.0
      %v1277 = vmax.f32 %v1213, 0.0
      %v1278 = vmax.f32 %v1214, 0.0
      %v1279 = vmax.f32 %v1215, 0.0
      %v1280 = vmax.f32 %v1216, 0.0
      %v1281 = vmax.f32 %v1217, 0.0
      %v1282 = vmax.f32 %v1218, 0.0
      %v1283 = vmax.f32 %v1219, 0.0
      %v1284 = vmax.f32 %v1220, 0.0
      %v1285 = vmax.f32 %v1221, 0.0
      %v1286 = vmax.f32 %v1222, 0.0
      %v1287 = vmax.f32 %v1223, 0.0
      %v1288 = vmax.f32 %v1224, 0.0
      %v1289 = vmax.f32 %v1225, 0.0
      %v1290 = vmax.f32 %v1226, 0.0
      %v1291 = vmax.f32 %v1227, 0.0
      %v1292 = vmax.f32 %v1228, 0.0
      %v1293 = vmax.f32 %v1229, 0.0
      %v1294 = vmax.f32 %v1230, 0.0
      %v1295 = vmax.f32 %v1231, 0.0
      %v1296 = vmax.f32 %v1232, 0.0
      %v1297 = vmax.f32 %v1233, 0.0
      %v1298 = vmax.f32 %v1234, 0.0
      %v1299 = vmax.f32 %v1235, 0.0
      %v1300 = vmax.f32 %v1236, 0.0
      %1301 = vst.msk [vmem:[#allocation2] sm:$0xff] %vm1034, %v1237
      %1302 = vst.msk [vmem:[#allocation2 + $0x8] sm:$0xff] %vm1034, %v1238
      %1303 = vst.msk [vmem:[#allocation2 + $0x10] sm:$0xff] %vm1034, %v1239
      %1304 = vst.msk [vmem:[#allocation2 + $0x18] sm:$0xff] %vm1034, %v1240
      %1305 = vst.msk [vmem:[#allocation2 + $0x20] sm:$0xff] %vm1034, %v1241
      %1306 = vst.msk [vmem:[#allocation2 + $0x28] sm:$0xff] %vm1034, %v1242
      %1307 = vst.msk [vmem:[#allocation2 + $0x30] sm:$0xff] %vm1034, %v1243
      %1308 = vst.msk [vmem:[#allocation2 + $0x38] sm:$0xff] %vm1034, %v1244
      %1309 = vst.msk [vmem:[#allocation2 + $0x40] sm:$0xff] %vm1034, %v1245
      %1310 = vst.msk [vmem:[#allocation2 + $0x48] sm:$0xff] %vm1034, %v1246
      %1311 = vst.msk [vmem:[#allocation2 + $0x50] sm:$0xff] %vm1034, %v1247
      %1312 = vst.msk [vmem:[#allocation2 + $0x58] sm:$0xff] %vm1034, %v1248
      %1313 = vst.msk [vmem:[#allocation2 + $0x60] sm:$0xff] %vm1034, %v1249
      %1314 = vst.msk [vmem:[#allocation2 + $0x68] sm:$0xff] %vm1034, %v1250
      %1315 = vst.msk [vmem:[#allocation2 + $0x70] sm:$0xff] %vm1034, %v1251
      %1316 = vst.msk [vmem:[#allocation2 + $0x78] sm:$0xff] %vm1034, %v1252
      %1317 = vst.msk [vmem:[#allocation2 + $0x80] sm:$0xff] %vm1034, %v1253
      %1318 = vst.msk [vmem:[#allocation2 + $0x88] sm:$0xff] %vm1034, %v1254
      %1319 = vst.msk [vmem:[#allocation2 + $0x90] sm:$0xff] %vm1034, %v1255
      %1320 = vst.msk [vmem:[#allocation2 + $0x98] sm:$0xff] %vm1034, %v1256
      %1321 = vst.msk [vmem:[#allocation2 + $0xa0] sm:$0xff] %vm1034, %v1257
      %1322 = vst.msk [vmem:[#allocation2 + $0xa8] sm:$0xff] %vm1034, %v1258
      %1323 = vst.msk [vmem:[#allocation2 + $0xb0] sm:$0xff] %vm1034, %v1259
      %1324 = vst.msk [vmem:[#allocation2 + $0xb8] sm:$0xff] %vm1034, %v1260
      %1325 = vst.msk [vmem:[#allocation2 + $0xc0] sm:$0xff] %vm1034, %v1261
      %1326 = vst.msk [vmem:[#allocation2 + $0xc8] sm:$0xff] %vm1034, %v1262
      %1327 = vst.msk [vmem:[#allocation2 + $0xd0] sm:$0xff] %vm1034, %v1263
      %1328 = vst.msk [vmem:[#allocation2 + $0xd8] sm:$0xff] %vm1034, %v1264
      %1329 = vst.msk [vmem:[#allocation2 + $0xe0] sm:$0xff] %vm1034, %v1265
      %1330 = vst.msk [vmem:[#allocation2 + $0xe8] sm:$0xff] %vm1034, %v1266
      %1331 = vst.msk [vmem:[#allocation2 + $0xf0] sm:$0xff] %vm1034, %v1267
      %1332 = vst.msk [vmem:[#allocation2 + $0xf8] sm:$0xff] %vm1034, %v1268
      %1333 = vst.msk [vmem:[#allocation2 + $0x100] sm:$0xff] %vm1034, %v1269
      %1334 = vst.msk [vmem:[#allocation2 + $0x108] sm:$0xff] %vm1034, %v1270
      %1335 = vst.msk [vmem:[#allocation2 + $0x110] sm:$0xff] %vm1034, %v1271
      %1336 = vst.msk [vmem:[#allocation2 + $0x118] sm:$0xff] %vm1034, %v1272
      %1337 = vst.msk [vmem:[#allocation2 + $0x120] sm:$0xff] %vm1034, %v1273
      %1338 = vst.msk [vmem:[#allocation2 + $0x128] sm:$0xff] %vm1034, %v1274
      %1339 = vst.msk [vmem:[#allocation2 + $0x130] sm:$0xff] %vm1034, %v1275
      %1340 = vst.msk [vmem:[#allocation2 + $0x138] sm:$0xff] %vm1034, %v1276
      %1341 = vst.msk [vmem:[#allocation2 + $0x140] sm:$0xff] %vm1034, %v1277
      %1342 = vst.msk [vmem:[#allocation2 + $0x148] sm:$0xff] %vm1034, %v1278
      %1343 = vst.msk [vmem:[#allocation2 + $0x150] sm:$0xff] %vm1034, %v1279
      %1344 = vst.msk [vmem:[#allocation2 + $0x158] sm:$0xff] %vm1034, %v1280
      %1345 = vst.msk [vmem:[#allocation2 + $0x160] sm:$0xff] %vm1034, %v1281
      %1346 = vst.msk [vmem:[#allocation2 + $0x168] sm:$0xff] %vm1034, %v1282
      %1347 = vst.msk [vmem:[#allocation2 + $0x170] sm:$0xff] %vm1034, %v1283
      %1348 = vst.msk [vmem:[#allocation2 + $0x178] sm:$0xff] %vm1034, %v1284
      %1349 = vst.msk [vmem:[#allocation2 + $0x180] sm:$0xff] %vm1034, %v1285
      %1350 = vst.msk [vmem:[#allocation2 + $0x188] sm:$0xff] %vm1034, %v1286
      %1351 = vst.msk [vmem:[#allocation2 + $0x190] sm:$0xff] %vm1034, %v1287
      %1352 = vst.msk [vmem:[#allocation2 + $0x198] sm:$0xff] %vm1034, %v1288
      %1353 = vst.msk [vmem:[#allocation2 + $0x1a0] sm:$0xff] %vm1034, %v1289
      %1354 = vst.msk [vmem:[#allocation2 + $0x1a8] sm:$0xff] %vm1034, %v1290
      %1355 = vst.msk [vmem:[#allocation2 + $0x1b0] sm:$0xff] %vm1034, %v1291
      %1356 = vst.msk [vmem:[#allocation2 + $0x1b8] sm:$0xff] %vm1034, %v1292
      %1357 = vst.msk [vmem:[#allocation2 + $0x1c0] sm:$0xff] %vm1034, %v1293
      %1358 = vst.msk [vmem:[#allocation2 + $0x1c8] sm:$0xff] %vm1034, %v1294
      %1359 = vst.msk [vmem:[#allocation2 + $0x1d0] sm:$0xff] %vm1034, %v1295
      %1360 = vst.msk [vmem:[#allocation2 + $0x1d8] sm:$0xff] %vm1034, %v1296
      %1361 = vst.msk [vmem:[#allocation2 + $0x1e0] sm:$0xff] %vm1034, %v1297
      %1362 = vst.msk [vmem:[#allocation2 + $0x1e8] sm:$0xff] %vm1034, %v1298
      %1363 = vst.msk [vmem:[#allocation2 + $0x1f0] sm:$0xff] %vm1034, %v1299
      %1364 = vst.msk [vmem:[#allocation2 + $0x1f8] sm:$0xff] %vm1034, %v1300
    $region21: #{_conv2d_nhwc.1} parent=1 // pred_fallthru
      _
    // Predicated region
    $region22: #{_conv2d_nhwc.1} parent=1 // pred_check
      _
    $region23: #{_conv2d_nhwc.1} parent=1 // pred_check_branch
      %1366 = sbr.rel (0) target = $region25
    $region24: #{_conv2d_nhwc.1} parent=1 // pred_region
      %s1368 = ssub.s32 8192, 8192
      %1369 = vsyncadd [#allocation3], %s1368
      %s1370 = sshll.u32 [#allocation2], 4
      %s1371 = int_to_ptr.vmem [resolvable:$true] %s1370
      %1376 = dma.vmem_to_hbm [thread:$0]  %s1371, 8192, %s3, [#allocation3], 128, 128, 8
    $region25: #{_conv2d_nhwc.1} parent=1 // pred_fallthru
      _
    // Predicated region
    $region26: #{_conv2d_nhwc.1} parent=1 // pred_check
      _
    $region27: #{_conv2d_nhwc.1} parent=1 // pred_check_branch
      %1378 = sbr.rel (0) target = $region29
    $region28: #{_conv2d_nhwc.1} parent=1 // pred_region
      %1379 = dma.done [#allocation3], 8192
    $region29: #{_conv2d_nhwc.1} parent=1 // pred_fallthru
      _
    %1380 = vsyncpa [#allocation3], 1

</llo_original>
